<compile_context>
chip_gen: v7x
topology: tpu7x:2x2x1
jax: 0.10.0
libtpu: 0.0.40
codegen_flags: <defaults>
</compile_context>

<pallas_src>
import functools

import jax
import jax.numpy as jnp
import numpy as np
from jax.experimental import pallas as pl
from jax.experimental.pallas import tpu as pltpu


def _round_up(x, m):
    return (x + m - 1) // m * m


def _mha_kernel(x_ref, wqkv_ref, wo_ref, bo_ref, out_ref, *, n_heads, d_model):
    B, S, Dp = x_ref.shape
    D, H = d_model, n_heads
    hs = D // H
    bf16, f32 = jnp.bfloat16, jnp.float32

    # ---- Fused QKV projection: one lane-dense bf16 MXU matmul with f32 accumulation.
    # x carries a ones column at index D and wqkv's row D carries [bq*scale | bk | bv],
    # so the bias add (and the Q score scale) happens inside the MXU accumulator.
    x2 = x_ref[...].reshape(B * S, Dp)                               # merge batch into sublanes
    qkv = jnp.dot(x2, wqkv_ref[...], preferred_element_type=f32)     # (B*S, 3*D)

    # Single f32 -> bf16 downcast pass over each projection (biases already included).
    q = qkv[:, 0 * D:1 * D].astype(bf16)                             # pre-scaled by 1/sqrt(D)
    k = qkv[:, 1 * D:2 * D].astype(bf16)
    v = qkv[:, 2 * D:3 * D].astype(bf16)

    # ---- Per-(batch, head) attention core.  The hs-wide operands are inherently small,
    # so this is the same MXU work as a head-batched einsum on (H, S, hs); the static
    # unroll simply avoids lane-splitting reshapes / 4-D relayouts at these tiny sizes.
    rows = []
    for b in range(B):
        r = slice(b * S, (b + 1) * S)
        heads = []
        for h in range(H):
            c = slice(h * hs, (h + 1) * hs)
            qh, kh, vh = q[r, c], k[r, c], v[r, c]                   # (S, hs) bf16
            s = jnp.einsum("qe,ke->qk", qh, kh,
                           preferred_element_type=f32)               # (S, S) f32
            p = jnp.exp(s - jnp.max(s, axis=-1, keepdims=True))
            l = jnp.sum(p, axis=-1, keepdims=True)
            pv = jnp.dot(p.astype(bf16), vh,
                         preferred_element_type=f32)                 # (S, hs) f32
            # Exact reciprocal (l >= 1, well conditioned) applied to the small PV result.
            heads.append((pv * pl.reciprocal(l, approx=False)).astype(bf16))
        rows.append(jnp.concatenate(heads, axis=-1))                 # (S, D): heads on lanes
    o = jnp.concatenate(rows, axis=0)                                # (B*S, D) bf16

    # ---- Output projection: concat_h(o_h) @ Wo as ONE matmul; the cross-head sum is
    # performed inside the MXU f32 accumulator (no (H, S, D) intermediate, no H-sum).
    out = jnp.dot(o, wo_ref[...], preferred_element_type=f32)        # (B*S, Do)
    out_ref[...] = (out.reshape(B, S, -1) + bo_ref[...]).astype(out_ref.dtype)


def multi_head_attention(x, params, *, n_heads):
    """x: (B, S, D) float32.  params: PyTorch-Linear weights pre-transposed to (in, out)."""
    B, S, D = x.shape
    H = n_heads
    scale = 1.0 / (D ** 0.5)                  # sqrt(d_model), as in the PyTorch module
    bf16, f32 = jnp.bfloat16, jnp.float32

    # Lane-dense padded sizes: Dp (contraction dim, includes the ones/bias column) and
    # Do (output dim).  The padding is sliced off after the call.
    Dp = _round_up(D + 1, 128)
    Do = _round_up(D, 128)

    # x padded to Dp lanes with a ones column at index D (bias fold), zeros afterwards.
    x_p = jnp.concatenate(
        [x, jnp.ones((B, S, 1), f32), jnp.zeros((B, S, Dp - D - 1), f32)],
        axis=-1).astype(bf16)                                                     # (B, S, Dp)

    # Fused QKV weight: columns [ wq*scale | wk | wv ]; row D holds the (scaled) biases so
    # x's ones column adds them inside the matmul; remaining rows are zero padding.
    wqkv = jnp.concatenate(
        [params["wq"] * scale, params["wk"], params["wv"]], axis=1)               # (D, 3D)
    bqkv = jnp.concatenate(
        [params["bq"] * scale, params["bk"], params["bv"]], axis=1)               # (1, 3D)
    wqkv_p = jnp.concatenate(
        [wqkv, bqkv, jnp.zeros((Dp - D - 1, 3 * D), f32)], axis=0).astype(bf16)   # (Dp, 3D)

    # Output projection weight/bias padded to Do lanes (pad columns are zero).
    wo_p = jnp.concatenate(
        [params["wo"], jnp.zeros((D, Do - D), f32)], axis=1).astype(bf16)         # (D, Do)
    bo_p = jnp.concatenate(
        [params["bo"], jnp.zeros((1, Do - D), f32)], axis=1)                      # (1, Do) f32

    kernel = functools.partial(_mha_kernel, n_heads=H, d_model=D)

    # Grid collapsed to (): the whole problem (< 200 KiB) is far below one VMEM tile, so a
    # single invocation with whole-array VMEM blocks avoids all per-grid-step overhead.
    # NOTE: at ViT-Base sizes / on v7x, reintroduce grid=(B, S // TQ), mark axes
    # "parallel", and single-buffer the constant weight specs with pl.Buffered(1).
    out = pl.pallas_call(
        kernel,
        out_shape=jax.ShapeDtypeStruct((B, S, Do), f32),
        in_specs=[pl.BlockSpec(memory_space=pltpu.MemorySpace.VMEM)] * 4,
        out_specs=pl.BlockSpec(memory_space=pltpu.MemorySpace.VMEM),
    )(x_p, wqkv_p, wo_p, bo_p)
    return out[..., :D]


def _init_params(key, d_model, n_heads):
    """Deterministic init; PyTorch Linear shapes, pre-transposed to (in, out) layout."""
    head_size = d_model // n_heads
    keys = jax.random.split(key, 8)
    lim = 1.0 / np.sqrt(d_model)

    def u(k, shape):
        return jax.random.uniform(k, shape, jnp.float32, -lim, lim)

    wq = u(keys[0], (d_model, n_heads * head_size))
    wk = u(keys[1], (d_model, n_heads * head_size))
    wv = u(keys[2], (d_model, n_heads * head_size))
    bq = u(keys[3], (1, n_heads * head_size))
    bk = u(keys[4], (1, n_heads * head_size))
    bv = u(keys[5], (1, n_heads * head_size))
    wo = u(keys[6], (d_model, d_model))
    bo = u(keys[7], (1, d_model))
    return dict(wq=wq, bq=bq, wk=wk, bk=bk, wv=wv, bv=bv, wo=wo, bo=bo)


def _reference_mha(x, params, *, n_heads):
    """Pure-JAX f32 reference mirroring the PyTorch module semantics."""
    D = x.shape[-1]
    hs = D // n_heads
    q = x @ params["wq"] + params["bq"]
    k = x @ params["wk"] + params["bk"]
    v = x @ params["wv"] + params["bv"]
    outs = []
    for h in range(n_heads):
        qh = q[..., h * hs:(h + 1) * hs]
        kh = k[..., h * hs:(h + 1) * hs]
        vh = v[..., h * hs:(h + 1) * hs]
        scores = jnp.einsum("bqd,bkd->bqk", qh, kh) / (D ** 0.5)
        attn = jax.nn.softmax(scores, axis=-1)
        outs.append(jnp.einsum("bqk,bkd->bqd", attn, vh))
    concat = jnp.concatenate(outs, axis=-1)
    return concat @ params["wo"] + params["bo"]


if __name__ == "__main__":
    B, S, d_model, n_heads = 2, 8, 64, 4

    key = jax.random.PRNGKey(0)
    kx, kp = jax.random.split(key)
    x = jax.random.normal(kx, (B, S, d_model), jnp.float32)
    params = _init_params(kp, d_model, n_heads)

    out = multi_head_attention(x, params, n_heads=n_heads)
    out = jax.block_until_ready(out)

    ref = _reference_mha(x, params, n_heads=n_heads)
    # bf16 MXU inputs with f32 accumulation + exact reciprocal -> mild tolerance.
    np.testing.assert_allclose(np.asarray(out), np.asarray(ref), rtol=2e-2, atol=5e-3)

    print("KERNEL_OK")
</pallas_src>

<mosaic_0001>
module attributes {stable_mosaic.version = 11 : i64} {
  func.func @_mha_kernel(%arg0: memref<2x8x128xbf16, #tpu.memory_space<vmem>>, %arg1: memref<128x192xbf16, #tpu.memory_space<vmem>>, %arg2: memref<64x128xbf16, #tpu.memory_space<vmem>>, %arg3: memref<1x128xf32, #tpu.memory_space<vmem>>, %arg4: memref<2x8x128xf32, #tpu.memory_space<vmem>>) attributes {dimension_semantics = [], scalar_prefetch = 0 : i64, scratch_operands = 0 : i64, tpu.core_type = #tpu.core_type<tc>} {
    %c0 = arith.constant 0 : index
    %c0_0 = arith.constant 0 : index
    %c0_1 = arith.constant 0 : index
    %0 = vector.load %arg0[%c0, %c0_0, %c0_1] : memref<2x8x128xbf16, #tpu.memory_space<vmem>>, vector<2x8x128xbf16>
    %1 = vector.shape_cast %0 : vector<2x8x128xbf16> to vector<16x128xbf16>
    %c0_2 = arith.constant 0 : index
    %c0_3 = arith.constant 0 : index
    %2 = vector.load %arg1[%c0_2, %c0_3] : memref<128x192xbf16, #tpu.memory_space<vmem>>, vector<128x192xbf16>
    %cst = arith.constant dense<0.000000e+00> : vector<16x192xf32>
    %3 = tpu.matmul %1, %2, %cst {dimension_numbers = #tpu.dot_dimension_numbers<[1], [0], [0], [1], [0, 0, 1, 1], [], []>} : vector<16x128xbf16>, vector<128x192xbf16>, vector<16x192xf32> -> vector<16x192xf32>
    %4 = vector.extract_strided_slice %3 {offsets = [0, 0], sizes = [16, 64], strides = [1, 1]} : vector<16x192xf32> to vector<16x64xf32>
    %5 = arith.truncf %4 : vector<16x64xf32> to vector<16x64xbf16>
    %6 = vector.extract_strided_slice %3 {offsets = [0, 64], sizes = [16, 64], strides = [1, 1]} : vector<16x192xf32> to vector<16x64xf32>
    %7 = arith.truncf %6 : vector<16x64xf32> to vector<16x64xbf16>
    %8 = vector.extract_strided_slice %3 {offsets = [0, 128], sizes = [16, 64], strides = [1, 1]} : vector<16x192xf32> to vector<16x64xf32>
    %9 = arith.truncf %8 : vector<16x64xf32> to vector<16x64xbf16>
    %10 = vector.extract_strided_slice %5 {offsets = [0, 0], sizes = [8, 16], strides = [1, 1]} : vector<16x64xbf16> to vector<8x16xbf16>
    %11 = vector.extract_strided_slice %7 {offsets = [0, 0], sizes = [8, 16], strides = [1, 1]} : vector<16x64xbf16> to vector<8x16xbf16>
    %12 = vector.extract_strided_slice %9 {offsets = [0, 0], sizes = [8, 16], strides = [1, 1]} : vector<16x64xbf16> to vector<8x16xbf16>
    "tpu.trace_start"() <{level = 10 : i32, message = "qe,ke->qk"}> : () -> ()
    %cst_4 = arith.constant dense<0.000000e+00> : vector<8x8xf32>
    %13 = tpu.matmul %10, %11, %cst_4 {dimension_numbers = #tpu.dot_dimension_numbers<[1], [1], [0], [0], [0, 0, 1, 0], [], []>} : vector<8x16xbf16>, vector<8x16xbf16>, vector<8x8xf32> -> vector<8x8xf32>
    "tpu.trace_stop"() : () -> ()
    %cst_5 = arith.constant dense<0xFF800000> : vector<8xf32>
    %14 = vector.multi_reduction <maximumf>, %13, %cst_5 [1] : vector<8x8xf32> to vector<8xf32>
    %15 = vector.shape_cast %14 : vector<8xf32> to vector<8x1xf32>
    %16 = vector.broadcast %15 : vector<8x1xf32> to vector<8x8xf32>
    %17 = arith.subf %13, %16 : vector<8x8xf32>
    %18 = math.exp %17 : vector<8x8xf32>
    %cst_6 = arith.constant dense<0.000000e+00> : vector<8xf32>
    %19 = vector.multi_reduction <add>, %18, %cst_6 [1] : vector<8x8xf32> to vector<8xf32>
    %20 = vector.shape_cast %19 : vector<8xf32> to vector<8x1xf32>
    %21 = arith.truncf %18 : vector<8x8xf32> to vector<8x8xbf16>
    %cst_7 = arith.constant dense<0.000000e+00> : vector<8x16xf32>
    %22 = tpu.matmul %21, %12, %cst_7 {dimension_numbers = #tpu.dot_dimension_numbers<[1], [0], [0], [1], [0, 0, 1, 1], [], []>} : vector<8x8xbf16>, vector<8x16xbf16>, vector<8x16xf32> -> vector<8x16xf32>
    %23 = tpu.reciprocal %20 : vector<8x1xf32> -> vector<8x1xf32>
    %24 = vector.broadcast %23 : vector<8x1xf32> to vector<8x16xf32>
    %25 = arith.mulf %22, %24 : vector<8x16xf32>
    %26 = arith.truncf %25 : vector<8x16xf32> to vector<8x16xbf16>
    %27 = vector.extract_strided_slice %5 {offsets = [0, 16], sizes = [8, 16], strides = [1, 1]} : vector<16x64xbf16> to vector<8x16xbf16>
    %28 = vector.extract_strided_slice %7 {offsets = [0, 16], sizes = [8, 16], strides = [1, 1]} : vector<16x64xbf16> to vector<8x16xbf16>
    %29 = vector.extract_strided_slice %9 {offsets = [0, 16], sizes = [8, 16], strides = [1, 1]} : vector<16x64xbf16> to vector<8x16xbf16>
    "tpu.trace_start"() <{level = 10 : i32, message = "qe,ke->qk"}> : () -> ()
    %cst_8 = arith.constant dense<0.000000e+00> : vector<8x8xf32>
    %30 = tpu.matmul %27, %28, %cst_8 {dimension_numbers = #tpu.dot_dimension_numbers<[1], [1], [0], [0], [0, 0, 1, 0], [], []>} : vector<8x16xbf16>, vector<8x16xbf16>, vector<8x8xf32> -> vector<8x8xf32>
    "tpu.trace_stop"() : () -> ()
    %cst_9 = arith.constant dense<0xFF800000> : vector<8xf32>
    %31 = vector.multi_reduction <maximumf>, %30, %cst_9 [1] : vector<8x8xf32> to vector<8xf32>
    %32 = vector.shape_cast %31 : vector<8xf32> to vector<8x1xf32>
    %33 = vector.broadcast %32 : vector<8x1xf32> to vector<8x8xf32>
    %34 = arith.subf %30, %33 : vector<8x8xf32>
    %35 = math.exp %34 : vector<8x8xf32>
    %cst_10 = arith.constant dense<0.000000e+00> : vector<8xf32>
    %36 = vector.multi_reduction <add>, %35, %cst_10 [1] : vector<8x8xf32> to vector<8xf32>
    %37 = vector.shape_cast %36 : vector<8xf32> to vector<8x1xf32>
    %38 = arith.truncf %35 : vector<8x8xf32> to vector<8x8xbf16>
    %cst_11 = arith.constant dense<0.000000e+00> : vector<8x16xf32>
    %39 = tpu.matmul %38, %29, %cst_11 {dimension_numbers = #tpu.dot_dimension_numbers<[1], [0], [0], [1], [0, 0, 1, 1], [], []>} : vector<8x8xbf16>, vector<8x16xbf16>, vector<8x16xf32> -> vector<8x16xf32>
    %40 = tpu.reciprocal %37 : vector<8x1xf32> -> vector<8x1xf32>
    %41 = vector.broadcast %40 : vector<8x1xf32> to vector<8x16xf32>
    %42 = arith.mulf %39, %41 : vector<8x16xf32>
    %43 = arith.truncf %42 : vector<8x16xf32> to vector<8x16xbf16>
    %44 = vector.extract_strided_slice %5 {offsets = [0, 32], sizes = [8, 16], strides = [1, 1]} : vector<16x64xbf16> to vector<8x16xbf16>
    %45 = vector.extract_strided_slice %7 {offsets = [0, 32], sizes = [8, 16], strides = [1, 1]} : vector<16x64xbf16> to vector<8x16xbf16>
    %46 = vector.extract_strided_slice %9 {offsets = [0, 32], sizes = [8, 16], strides = [1, 1]} : vector<16x64xbf16> to vector<8x16xbf16>
    "tpu.trace_start"() <{level = 10 : i32, message = "qe,ke->qk"}> : () -> ()
    %cst_12 = arith.constant dense<0.000000e+00> : vector<8x8xf32>
    %47 = tpu.matmul %44, %45, %cst_12 {dimension_numbers = #tpu.dot_dimension_numbers<[1], [1], [0], [0], [0, 0, 1, 0], [], []>} : vector<8x16xbf16>, vector<8x16xbf16>, vector<8x8xf32> -> vector<8x8xf32>
    "tpu.trace_stop"() : () -> ()
    %cst_13 = arith.constant dense<0xFF800000> : vector<8xf32>
    %48 = vector.multi_reduction <maximumf>, %47, %cst_13 [1] : vector<8x8xf32> to vector<8xf32>
    %49 = vector.shape_cast %48 : vector<8xf32> to vector<8x1xf32>
    %50 = vector.broadcast %49 : vector<8x1xf32> to vector<8x8xf32>
    %51 = arith.subf %47, %50 : vector<8x8xf32>
    %52 = math.exp %51 : vector<8x8xf32>
    %cst_14 = arith.constant dense<0.000000e+00> : vector<8xf32>
    %53 = vector.multi_reduction <add>, %52, %cst_14 [1] : vector<8x8xf32> to vector<8xf32>
    %54 = vector.shape_cast %53 : vector<8xf32> to vector<8x1xf32>
    %55 = arith.truncf %52 : vector<8x8xf32> to vector<8x8xbf16>
    %cst_15 = arith.constant dense<0.000000e+00> : vector<8x16xf32>
    %56 = tpu.matmul %55, %46, %cst_15 {dimension_numbers = #tpu.dot_dimension_numbers<[1], [0], [0], [1], [0, 0, 1, 1], [], []>} : vector<8x8xbf16>, vector<8x16xbf16>, vector<8x16xf32> -> vector<8x16xf32>
    %57 = tpu.reciprocal %54 : vector<8x1xf32> -> vector<8x1xf32>
    %58 = vector.broadcast %57 : vector<8x1xf32> to vector<8x16xf32>
    %59 = arith.mulf %56, %58 : vector<8x16xf32>
    %60 = arith.truncf %59 : vector<8x16xf32> to vector<8x16xbf16>
    %61 = vector.extract_strided_slice %5 {offsets = [0, 48], sizes = [8, 16], strides = [1, 1]} : vector<16x64xbf16> to vector<8x16xbf16>
    %62 = vector.extract_strided_slice %7 {offsets = [0, 48], sizes = [8, 16], strides = [1, 1]} : vector<16x64xbf16> to vector<8x16xbf16>
    %63 = vector.extract_strided_slice %9 {offsets = [0, 48], sizes = [8, 16], strides = [1, 1]} : vector<16x64xbf16> to vector<8x16xbf16>
    "tpu.trace_start"() <{level = 10 : i32, message = "qe,ke->qk"}> : () -> ()
    %cst_16 = arith.constant dense<0.000000e+00> : vector<8x8xf32>
    %64 = tpu.matmul %61, %62, %cst_16 {dimension_numbers = #tpu.dot_dimension_numbers<[1], [1], [0], [0], [0, 0, 1, 0], [], []>} : vector<8x16xbf16>, vector<8x16xbf16>, vector<8x8xf32> -> vector<8x8xf32>
    "tpu.trace_stop"() : () -> ()
    %cst_17 = arith.constant dense<0xFF800000> : vector<8xf32>
    %65 = vector.multi_reduction <maximumf>, %64, %cst_17 [1] : vector<8x8xf32> to vector<8xf32>
    %66 = vector.shape_cast %65 : vector<8xf32> to vector<8x1xf32>
    %67 = vector.broadcast %66 : vector<8x1xf32> to vector<8x8xf32>
    %68 = arith.subf %64, %67 : vector<8x8xf32>
    %69 = math.exp %68 : vector<8x8xf32>
    %cst_18 = arith.constant dense<0.000000e+00> : vector<8xf32>
    %70 = vector.multi_reduction <add>, %69, %cst_18 [1] : vector<8x8xf32> to vector<8xf32>
    %71 = vector.shape_cast %70 : vector<8xf32> to vector<8x1xf32>
    %72 = arith.truncf %69 : vector<8x8xf32> to vector<8x8xbf16>
    %cst_19 = arith.constant dense<0.000000e+00> : vector<8x16xf32>
    %73 = tpu.matmul %72, %63, %cst_19 {dimension_numbers = #tpu.dot_dimension_numbers<[1], [0], [0], [1], [0, 0, 1, 1], [], []>} : vector<8x8xbf16>, vector<8x16xbf16>, vector<8x16xf32> -> vector<8x16xf32>
    %74 = tpu.reciprocal %71 : vector<8x1xf32> -> vector<8x1xf32>
    %75 = vector.broadcast %74 : vector<8x1xf32> to vector<8x16xf32>
    %76 = arith.mulf %73, %75 : vector<8x16xf32>
    %77 = arith.truncf %76 : vector<8x16xf32> to vector<8x16xbf16>
    %78 = tpu.concatenate %26, %43, %60, %77 in 1 : vector<8x16xbf16>, vector<8x16xbf16>, vector<8x16xbf16>, vector<8x16xbf16> -> vector<8x64xbf16>
    %79 = vector.extract_strided_slice %5 {offsets = [8, 0], sizes = [8, 16], strides = [1, 1]} : vector<16x64xbf16> to vector<8x16xbf16>
    %80 = vector.extract_strided_slice %7 {offsets = [8, 0], sizes = [8, 16], strides = [1, 1]} : vector<16x64xbf16> to vector<8x16xbf16>
    %81 = vector.extract_strided_slice %9 {offsets = [8, 0], sizes = [8, 16], strides = [1, 1]} : vector<16x64xbf16> to vector<8x16xbf16>
    "tpu.trace_start"() <{level = 10 : i32, message = "qe,ke->qk"}> : () -> ()
    %cst_20 = arith.constant dense<0.000000e+00> : vector<8x8xf32>
    %82 = tpu.matmul %79, %80, %cst_20 {dimension_numbers = #tpu.dot_dimension_numbers<[1], [1], [0], [0], [0, 0, 1, 0], [], []>} : vector<8x16xbf16>, vector<8x16xbf16>, vector<8x8xf32> -> vector<8x8xf32>
    "tpu.trace_stop"() : () -> ()
    %cst_21 = arith.constant dense<0xFF800000> : vector<8xf32>
    %83 = vector.multi_reduction <maximumf>, %82, %cst_21 [1] : vector<8x8xf32> to vector<8xf32>
    %84 = vector.shape_cast %83 : vector<8xf32> to vector<8x1xf32>
    %85 = vector.broadcast %84 : vector<8x1xf32> to vector<8x8xf32>
    %86 = arith.subf %82, %85 : vector<8x8xf32>
    %87 = math.exp %86 : vector<8x8xf32>
    %cst_22 = arith.constant dense<0.000000e+00> : vector<8xf32>
    %88 = vector.multi_reduction <add>, %87, %cst_22 [1] : vector<8x8xf32> to vector<8xf32>
    %89 = vector.shape_cast %88 : vector<8xf32> to vector<8x1xf32>
    %90 = arith.truncf %87 : vector<8x8xf32> to vector<8x8xbf16>
    %cst_23 = arith.constant dense<0.000000e+00> : vector<8x16xf32>
    %91 = tpu.matmul %90, %81, %cst_23 {dimension_numbers = #tpu.dot_dimension_numbers<[1], [0], [0], [1], [0, 0, 1, 1], [], []>} : vector<8x8xbf16>, vector<8x16xbf16>, vector<8x16xf32> -> vector<8x16xf32>
    %92 = tpu.reciprocal %89 : vector<8x1xf32> -> vector<8x1xf32>
    %93 = vector.broadcast %92 : vector<8x1xf32> to vector<8x16xf32>
    %94 = arith.mulf %91, %93 : vector<8x16xf32>
    %95 = arith.truncf %94 : vector<8x16xf32> to vector<8x16xbf16>
    %96 = vector.extract_strided_slice %5 {offsets = [8, 16], sizes = [8, 16], strides = [1, 1]} : vector<16x64xbf16> to vector<8x16xbf16>
    %97 = vector.extract_strided_slice %7 {offsets = [8, 16], sizes = [8, 16], strides = [1, 1]} : vector<16x64xbf16> to vector<8x16xbf16>
    %98 = vector.extract_strided_slice %9 {offsets = [8, 16], sizes = [8, 16], strides = [1, 1]} : vector<16x64xbf16> to vector<8x16xbf16>
    "tpu.trace_start"() <{level = 10 : i32, message = "qe,ke->qk"}> : () -> ()
    %cst_24 = arith.constant dense<0.000000e+00> : vector<8x8xf32>
    %99 = tpu.matmul %96, %97, %cst_24 {dimension_numbers = #tpu.dot_dimension_numbers<[1], [1], [0], [0], [0, 0, 1, 0], [], []>} : vector<8x16xbf16>, vector<8x16xbf16>, vector<8x8xf32> -> vector<8x8xf32>
    "tpu.trace_stop"() : () -> ()
    %cst_25 = arith.constant dense<0xFF800000> : vector<8xf32>
    %100 = vector.multi_reduction <maximumf>, %99, %cst_25 [1] : vector<8x8xf32> to vector<8xf32>
    %101 = vector.shape_cast %100 : vector<8xf32> to vector<8x1xf32>
    %102 = vector.broadcast %101 : vector<8x1xf32> to vector<8x8xf32>
    %103 = arith.subf %99, %102 : vector<8x8xf32>
    %104 = math.exp %103 : vector<8x8xf32>
    %cst_26 = arith.constant dense<0.000000e+00> : vector<8xf32>
    %105 = vector.multi_reduction <add>, %104, %cst_26 [1] : vector<8x8xf32> to vector<8xf32>
    %106 = vector.shape_cast %105 : vector<8xf32> to vector<8x1xf32>
    %107 = arith.truncf %104 : vector<8x8xf32> to vector<8x8xbf16>
    %cst_27 = arith.constant dense<0.000000e+00> : vector<8x16xf32>
    %108 = tpu.matmul %107, %98, %cst_27 {dimension_numbers = #tpu.dot_dimension_numbers<[1], [0], [0], [1], [0, 0, 1, 1], [], []>} : vector<8x8xbf16>, vector<8x16xbf16>, vector<8x16xf32> -> vector<8x16xf32>
    %109 = tpu.reciprocal %106 : vector<8x1xf32> -> vector<8x1xf32>
    %110 = vector.broadcast %109 : vector<8x1xf32> to vector<8x16xf32>
    %111 = arith.mulf %108, %110 : vector<8x16xf32>
    %112 = arith.truncf %111 : vector<8x16xf32> to vector<8x16xbf16>
    %113 = vector.extract_strided_slice %5 {offsets = [8, 32], sizes = [8, 16], strides = [1, 1]} : vector<16x64xbf16> to vector<8x16xbf16>
    %114 = vector.extract_strided_slice %7 {offsets = [8, 32], sizes = [8, 16], strides = [1, 1]} : vector<16x64xbf16> to vector<8x16xbf16>
    %115 = vector.extract_strided_slice %9 {offsets = [8, 32], sizes = [8, 16], strides = [1, 1]} : vector<16x64xbf16> to vector<8x16xbf16>
    "tpu.trace_start"() <{level = 10 : i32, message = "qe,ke->qk"}> : () -> ()
    %cst_28 = arith.constant dense<0.000000e+00> : vector<8x8xf32>
    %116 = tpu.matmul %113, %114, %cst_28 {dimension_numbers = #tpu.dot_dimension_numbers<[1], [1], [0], [0], [0, 0, 1, 0], [], []>} : vector<8x16xbf16>, vector<8x16xbf16>, vector<8x8xf32> -> vector<8x8xf32>
    "tpu.trace_stop"() : () -> ()
    %cst_29 = arith.constant dense<0xFF800000> : vector<8xf32>
    %117 = vector.multi_reduction <maximumf>, %116, %cst_29 [1] : vector<8x8xf32> to vector<8xf32>
    %118 = vector.shape_cast %117 : vector<8xf32> to vector<8x1xf32>
    %119 = vector.broadcast %118 : vector<8x1xf32> to vector<8x8xf32>
    %120 = arith.subf %116, %119 : vector<8x8xf32>
    %121 = math.exp %120 : vector<8x8xf32>
    %cst_30 = arith.constant dense<0.000000e+00> : vector<8xf32>
    %122 = vector.multi_reduction <add>, %121, %cst_30 [1] : vector<8x8xf32> to vector<8xf32>
    %123 = vector.shape_cast %122 : vector<8xf32> to vector<8x1xf32>
    %124 = arith.truncf %121 : vector<8x8xf32> to vector<8x8xbf16>
    %cst_31 = arith.constant dense<0.000000e+00> : vector<8x16xf32>
    %125 = tpu.matmul %124, %115, %cst_31 {dimension_numbers = #tpu.dot_dimension_numbers<[1], [0], [0], [1], [0, 0, 1, 1], [], []>} : vector<8x8xbf16>, vector<8x16xbf16>, vector<8x16xf32> -> vector<8x16xf32>
    %126 = tpu.reciprocal %123 : vector<8x1xf32> -> vector<8x1xf32>
    %127 = vector.broadcast %126 : vector<8x1xf32> to vector<8x16xf32>
    %128 = arith.mulf %125, %127 : vector<8x16xf32>
    %129 = arith.truncf %128 : vector<8x16xf32> to vector<8x16xbf16>
    %130 = vector.extract_strided_slice %5 {offsets = [8, 48], sizes = [8, 16], strides = [1, 1]} : vector<16x64xbf16> to vector<8x16xbf16>
    %131 = vector.extract_strided_slice %7 {offsets = [8, 48], sizes = [8, 16], strides = [1, 1]} : vector<16x64xbf16> to vector<8x16xbf16>
    %132 = vector.extract_strided_slice %9 {offsets = [8, 48], sizes = [8, 16], strides = [1, 1]} : vector<16x64xbf16> to vector<8x16xbf16>
    "tpu.trace_start"() <{level = 10 : i32, message = "qe,ke->qk"}> : () -> ()
    %cst_32 = arith.constant dense<0.000000e+00> : vector<8x8xf32>
    %133 = tpu.matmul %130, %131, %cst_32 {dimension_numbers = #tpu.dot_dimension_numbers<[1], [1], [0], [0], [0, 0, 1, 0], [], []>} : vector<8x16xbf16>, vector<8x16xbf16>, vector<8x8xf32> -> vector<8x8xf32>
    "tpu.trace_stop"() : () -> ()
    %cst_33 = arith.constant dense<0xFF800000> : vector<8xf32>
    %134 = vector.multi_reduction <maximumf>, %133, %cst_33 [1] : vector<8x8xf32> to vector<8xf32>
    %135 = vector.shape_cast %134 : vector<8xf32> to vector<8x1xf32>
    %136 = vector.broadcast %135 : vector<8x1xf32> to vector<8x8xf32>
    %137 = arith.subf %133, %136 : vector<8x8xf32>
    %138 = math.exp %137 : vector<8x8xf32>
    %cst_34 = arith.constant dense<0.000000e+00> : vector<8xf32>
    %139 = vector.multi_reduction <add>, %138, %cst_34 [1] : vector<8x8xf32> to vector<8xf32>
    %140 = vector.shape_cast %139 : vector<8xf32> to vector<8x1xf32>
    %141 = arith.truncf %138 : vector<8x8xf32> to vector<8x8xbf16>
    %cst_35 = arith.constant dense<0.000000e+00> : vector<8x16xf32>
    %142 = tpu.matmul %141, %132, %cst_35 {dimension_numbers = #tpu.dot_dimension_numbers<[1], [0], [0], [1], [0, 0, 1, 1], [], []>} : vector<8x8xbf16>, vector<8x16xbf16>, vector<8x16xf32> -> vector<8x16xf32>
    %143 = tpu.reciprocal %140 : vector<8x1xf32> -> vector<8x1xf32>
    %144 = vector.broadcast %143 : vector<8x1xf32> to vector<8x16xf32>
    %145 = arith.mulf %142, %144 : vector<8x16xf32>
    %146 = arith.truncf %145 : vector<8x16xf32> to vector<8x16xbf16>
    %147 = tpu.concatenate %95, %112, %129, %146 in 1 : vector<8x16xbf16>, vector<8x16xbf16>, vector<8x16xbf16>, vector<8x16xbf16> -> vector<8x64xbf16>
    %148 = tpu.concatenate %78, %147 in 0 : vector<8x64xbf16>, vector<8x64xbf16> -> vector<16x64xbf16>
    %c0_36 = arith.constant 0 : index
    %c0_37 = arith.constant 0 : index
    %149 = vector.load %arg2[%c0_36, %c0_37] : memref<64x128xbf16, #tpu.memory_space<vmem>>, vector<64x128xbf16>
    %cst_38 = arith.constant dense<0.000000e+00> : vector<16x128xf32>
    %150 = tpu.matmul %148, %149, %cst_38 {dimension_numbers = #tpu.dot_dimension_numbers<[1], [0], [0], [1], [0, 0, 1, 1], [], []>} : vector<16x64xbf16>, vector<64x128xbf16>, vector<16x128xf32> -> vector<16x128xf32>
    %151 = vector.shape_cast %150 : vector<16x128xf32> to vector<2x8x128xf32>
    %c0_39 = arith.constant 0 : index
    %c0_40 = arith.constant 0 : index
    %152 = vector.load %arg3[%c0_39, %c0_40] : memref<1x128xf32, #tpu.memory_space<vmem>>, vector<1x128xf32>
    %153 = vector.shape_cast %152 : vector<1x128xf32> to vector<1x1x128xf32>
    %154 = vector.broadcast %153 : vector<1x1x128xf32> to vector<2x8x128xf32>
    %155 = arith.addf %151, %154 : vector<2x8x128xf32>
    %c0_41 = arith.constant 0 : index
    %c0_42 = arith.constant 0 : index
    %c0_43 = arith.constant 0 : index
    %156 = vector.load %arg4[%c0_41, %c0_42, %c0_43] : memref<2x8x128xf32, #tpu.memory_space<vmem>>, vector<2x8x128xf32>
    tpu.vector_store %arg4[%c0_41, %c0_42, %c0_43], %155 {strides = array<i32>} : memref<2x8x128xf32, #tpu.memory_space<vmem>>, vector<2x8x128xf32>,
    return
  }
}

</mosaic_0001>

<llo_original>
// kernel: tpu_custom_call.1
$region0: #{tpu_custom_call.1}
  #allocation0 [shape = 'u32[]', space=smem, size = 0x4, offset = 0x4, fixed_abs, tag = 'smem constant byte address 0x4 - core index']
  #allocation1 [shape = 'u32[144,128]{1,0:T(1,128)}', space=vmem, size = 0x12000, scoped, tag = 'internal scratch']
  %s0 = inlined_call_operand.vmem [shape: bf16[2,8,128], index: 0, kind: input, shape index: {}]
  %s1 = inlined_call_operand.vmem [shape: bf16[128,192], index: 1, kind: input, shape index: {}]
  %s2 = inlined_call_operand.vmem [shape: bf16[64,128], index: 2, kind: input, shape index: {}]
  %s3 = inlined_call_operand.vmem [shape: f32[1,128], index: 3, kind: input, shape index: {}]
  %s4 = inlined_call_operand.hbm [shape: f32[2,8,128], index: 4, kind: output, shape index: {}]
  %s5 = sld [smem:[#allocation0]]
  $region26: #{tpu_custom_call.1} parent=0
    _
  %s7 = ssub.s32 1, %s5
  %s8 = scalar_select 0, %s7, %s5
  $region1: #{tpu_custom_call.1} parent=0
    #allocation2 [shape = 'u8[8192]{0}', space=vmem, size = 0x2000, scoped, tag = 'output window, operand 0, single buffered']
    #allocation3 [shape = 's32[1]{0}', space=sflag, size = 0x4, scoped, tag = 'scoped memory for tpu_custom_call.1']
    %9 = vsyncpa [#allocation3], 0
    // Predicated region
    $region2: #{tpu_custom_call.1} parent=1 // pred_check
      _
    $region3: #{tpu_custom_call.1} parent=1 // pred_check_branch
      %11 = sbr.rel (0) target = $region5
    $region4: #{tpu_custom_call.1} parent=1 // pred_region
      _
    $region5: #{tpu_custom_call.1} parent=1 // pred_fallthru
      _
    // Predicated region
    $region6: #{tpu_custom_call.1} parent=1 // pred_check
      _
    $region7: #{tpu_custom_call.1} parent=1 // pred_check_branch
      %13 = sbr.rel (0) target = $region9
    $region8: #{tpu_custom_call.1} parent=1 // pred_region
      _
    $region9: #{tpu_custom_call.1} parent=1 // pred_fallthru
      _
    // Predicated region
    $region10: #{tpu_custom_call.1} parent=1 // pred_check
      _
    $region11: #{tpu_custom_call.1} parent=1 // pred_check_branch
      %15 = sbr.rel (0) target = $region13
    $region12: #{tpu_custom_call.1} parent=1 // pred_region
      _
    $region13: #{tpu_custom_call.1} parent=1 // pred_fallthru
      _
    // Predicated region
    $region14: #{tpu_custom_call.1} parent=1 // pred_check
      _
    $region15: #{tpu_custom_call.1} parent=1 // pred_check_branch
      %17 = sbr.rel (0) target = $region17
    $region16: #{tpu_custom_call.1} parent=1 // pred_region
      _
    $region17: #{tpu_custom_call.1} parent=1 // pred_fallthru
      _
    %v19 = vld [vmem:[%s0] sm:$0xf]
    %v20 = vld [vmem:[%s0 + $0x4] sm:$0xf]
    %v21 = vld [vmem:[%s1] sm:$0xff]
    %v22 = vld [vmem:[%s1 + $0x8] sm:$0xff]
    %v23 = vld [vmem:[%s1 + $0x10] sm:$0xff]
    %v24 = vld [vmem:[%s1 + $0x18] sm:$0xff]
    %v25 = vld [vmem:[%s1 + $0x20] sm:$0xff]
    %v26 = vld [vmem:[%s1 + $0x28] sm:$0xff]
    %v27 = vld [vmem:[%s1 + $0x30] sm:$0xff]
    %v28 = vld [vmem:[%s1 + $0x38] sm:$0xff]
    %v29 = vld [vmem:[%s1 + $0x40] sm:$0xff]
    %v30 = vld [vmem:[%s1 + $0x48] sm:$0xff]
    %v31 = vld [vmem:[%s1 + $0x50] sm:$0xff]
    %v32 = vld [vmem:[%s1 + $0x58] sm:$0xff]
    %v33 = vld [vmem:[%s1 + $0x60] sm:$0xff]
    %v34 = vld [vmem:[%s1 + $0x68] sm:$0xff]
    %v35 = vld [vmem:[%s1 + $0x70] sm:$0xff]
    %v36 = vld [vmem:[%s1 + $0x78] sm:$0xff]
    %v39 = vunpack.c.l.b16 %v19
    %v40 = vunpack.c.l.b16 %v20
    %v41 = vpack.c.b16 %v40, %v39
    %v59 = vunpack.c.l.b16 %v21
    %v60 = vunpack.c.h.b16 %v21
    %v61 = vunpack.c.l.b16 %v22
    %v62 = vunpack.c.h.b16 %v22
    %v63 = vunpack.c.l.b16 %v23
    %v64 = vunpack.c.h.b16 %v23
    %v65 = vunpack.c.l.b16 %v24
    %v66 = vunpack.c.h.b16 %v24
    %v67 = vunpack.c.l.b16 %v25
    %v68 = vunpack.c.h.b16 %v25
    %v69 = vunpack.c.l.b16 %v26
    %v70 = vunpack.c.h.b16 %v26
    %v71 = vunpack.c.l.b16 %v27
    %v72 = vunpack.c.h.b16 %v27
    %v73 = vunpack.c.l.b16 %v28
    %v74 = vunpack.c.h.b16 %v28
    %v75 = vunpack.c.l.b16 %v29
    %v76 = vunpack.c.h.b16 %v29
    %v77 = vunpack.c.l.b16 %v30
    %v78 = vunpack.c.h.b16 %v30
    %v79 = vunpack.c.l.b16 %v31
    %v80 = vunpack.c.h.b16 %v31
    %v81 = vunpack.c.l.b16 %v32
    %v82 = vunpack.c.h.b16 %v32
    %v83 = vunpack.c.l.b16 %v33
    %v84 = vunpack.c.h.b16 %v33
    %v85 = vunpack.c.l.b16 %v34
    %v86 = vunpack.c.h.b16 %v34
    %v87 = vunpack.c.l.b16 %v35
    %v88 = vunpack.c.h.b16 %v35
    %v89 = vunpack.c.l.b16 %v36
    %v90 = vunpack.c.h.b16 %v36
    %v91 = vpack.c.b16 %v61, %v59
    %v92 = vpack.c.b16 %v62, %v60
    %v93 = vpack.c.b16 %v65, %v63
    %v94 = vpack.c.b16 %v66, %v64
    %v95 = vpack.c.b16 %v69, %v67
    %v96 = vpack.c.b16 %v70, %v68
    %v97 = vpack.c.b16 %v73, %v71
    %v98 = vpack.c.b16 %v74, %v72
    %v99 = vpack.c.b16 %v77, %v75
    %v100 = vpack.c.b16 %v78, %v76
    %v101 = vpack.c.b16 %v81, %v79
    %v102 = vpack.c.b16 %v82, %v80
    %v103 = vpack.c.b16 %v85, %v83
    %v104 = vpack.c.b16 %v86, %v84
    %v105 = vpack.c.b16 %v89, %v87
    %v106 = vpack.c.b16 %v90, %v88
    %123 = vmatprep.subr.bf16.mxu0 %v92
    %124 = vmatpush1.bf16.msra.mxu0 %v91
    %125 = vmatprep.subr.bf16.mxu0 %v94
    %126 = vmatpush1.bf16.msra.mxu0 %v93
    %127 = vmatprep.subr.bf16.mxu0 %v96
    %128 = vmatpush1.bf16.msra.mxu0 %v95
    %129 = vmatprep.subr.bf16.mxu0 %v98
    %130 = vmatpush1.bf16.msra.mxu0 %v97
    %131 = vmatprep.subr.bf16.mxu0 %v100
    %132 = vmatpush1.bf16.msra.mxu0 %v99
    %133 = vmatprep.subr.bf16.mxu0 %v102
    %134 = vmatpush1.bf16.msra.mxu0 %v101
    %135 = vmatprep.subr.bf16.mxu0 %v104
    %136 = vmatpush1.bf16.msra.mxu0 %v103
    %137 = vmatprep.subr.bf16.mxu0 %v106
    %138 = vmatpush1.bf16.msra.mxu0 %v105
    %139 = vmatprep.subr.bf16.mxu0 0
    %140 = vmatpush1.bf16.msra.mxu0 0
    %141 = vmatprep.subr.bf16.mxu0 0
    %142 = vmatpush1.bf16.msra.mxu0 0
    %143 = vmatprep.subr.bf16.mxu0 0
    %144 = vmatpush1.bf16.msra.mxu0 0
    %145 = vmatprep.subr.bf16.mxu0 0
    %146 = vmatpush1.bf16.msra.mxu0 0
    %147 = vmatprep.subr.bf16.mxu0 0
    %148 = vmatpush1.bf16.msra.mxu0 0
    %149 = vmatprep.subr.bf16.mxu0 0
    %150 = vmatpush1.bf16.msra.mxu0 0
    %151 = vmatprep.subr.bf16.mxu0 0
    %152 = vmatpush1.bf16.msra.mxu0 0
    %153 = vmatprep.subr.bf16.mxu0 0
    %154 = vmatpush1.bf16.msra.mxu0 0
    %155 = vmatprep.mubr.bf16.mxu0 0
    %156 = vmatmul.mubr.bf16.gmra.mrb[0].mxu0 %v41
    %v157 = vpop.f32.mrb[0].mxu0
    %v158 = vadd.f32 0.0, %v157
    %v159 = vpop.f32.mrb[0].mxu0
    %v160 = vadd.f32 0.0, %v159
    %v161 = vpop.f32.mrb[0].mxu0
    %v162 = vadd.f32 0.0, %v161
    %v163 = vpop.f32.mrb[0].mxu0
    %v164 = vadd.f32 0.0, %v163
    %165 = vdwg.mxu0
    %v166 = vpack.c.bf16 %v162, %v158
    %v167 = vpack.c.bf16 %v164, %v160
    %169 = vrot.lane.b32.xlu0 %v166, 64
    %v170 = vpop.permute.xlu0 %169
    %vm171 = vcmask 130048
    %v173 = vsel %vm171, %v166, 0
    %v176 = vsel %vm171, %v170, 0
    %178 = vmatprep.subr.bf16.mxu0 0
    %179 = vmatpush1.bf16.xpose.msra.mxu0 %v176
    %180 = vmatprep.subr.bf16.mxu0 0
    %181 = vmatpush1.bf16.xpose.msra.mxu0 0
    %182 = vmatprep.subr.bf16.mxu0 0
    %183 = vmatpush1.bf16.xpose.msra.mxu0 0
    %184 = vmatprep.subr.bf16.mxu0 0
    %185 = vmatpush1.bf16.xpose.msra.mxu0 0
    %186 = vmatprep.subr.bf16.mxu0 0
    %187 = vmatpush1.bf16.xpose.msra.mxu0 0
    %188 = vmatprep.subr.bf16.mxu0 0
    %189 = vmatpush1.bf16.xpose.msra.mxu0 0
    %190 = vmatprep.subr.bf16.mxu0 0
    %191 = vmatpush1.bf16.xpose.msra.mxu0 0
    %192 = vmatprep.subr.bf16.mxu0 0
    %193 = vmatpush1.bf16.xpose.msra.mxu0 0
    %194 = vmatprep.subr.bf16.mxu0 0
    %195 = vmatpush1.bf16.xpose.msra.mxu0 0
    %196 = vmatprep.subr.bf16.mxu0 0
    %197 = vmatpush1.bf16.xpose.msra.mxu0 0
    %198 = vmatprep.subr.bf16.mxu0 0
    %199 = vmatpush1.bf16.xpose.msra.mxu0 0
    %200 = vmatprep.subr.bf16.mxu0 0
    %201 = vmatpush1.bf16.xpose.msra.mxu0 0
    %202 = vmatprep.subr.bf16.mxu0 0
    %203 = vmatpush1.bf16.xpose.msra.mxu0 0
    %204 = vmatprep.subr.bf16.mxu0 0
    %205 = vmatpush1.bf16.xpose.msra.mxu0 0
    %206 = vmatprep.subr.bf16.mxu0 0
    %207 = vmatpush1.bf16.xpose.msra.mxu0 0
    %208 = vmatprep.subr.bf16.mxu0 0
    %209 = vmatpush1.bf16.xpose.msra.mxu0 0
    %210 = vmatprep.mubr.bf16.mxu0 0
    %211 = vmatmul.mubr.bf16.gmra.mrb[0].mxu0 %v173
    %v212 = vpop.f32.mrb[0].mxu0
    %v213 = vadd.f32 0.0, %v212
    %v214 = vpop.f32.mrb[0].mxu0
    %v215 = vpop.f32.mrb[0].mxu0
    %v216 = vpop.f32.mrb[0].mxu0
    %217 = vdwg.mxu0
    %vm218 = vcmask 64512
    %v219 = vsel %vm218, %v213, -inf
    %220 = vmax.xlane.f32.xlu0 %v219
    %v221 = vpop.xlane.xlu0 %220
    %v222 = vsub.f32 %v213, %v221
    %v223 = vmul.f32 %v222, 1.442695
    %v224 = vpow.pop %v223
    %v225 = vsel %vm218, %v224, 0.0
    %226 = vadd.xlane.f32.xlu0 %v225
    %v227 = vpop.xlane.xlu0 %226
    %v228 = vpack.c.bf16 %v224, %v224
    %v230 = vsel %vm218, %v228, 0
    %vm232 = vcmask 1043456
    %v234 = vsel %vm232, %v167, 0
    %236 = vmatprep.subr.bf16.mxu0 0
    %237 = vmatpush1.bf16.msra.mxu0 %v234
    %238 = vmatprep.subr.bf16.mxu0 0
    %239 = vmatpush1.bf16.msra.mxu0 0
    %240 = vmatprep.subr.bf16.mxu0 0
    %241 = vmatpush1.bf16.msra.mxu0 0
    %242 = vmatprep.subr.bf16.mxu0 0
    %243 = vmatpush1.bf16.msra.mxu0 0
    %244 = vmatprep.subr.bf16.mxu0 0
    %245 = vmatpush1.bf16.msra.mxu0 0
    %246 = vmatprep.subr.bf16.mxu0 0
    %247 = vmatpush1.bf16.msra.mxu0 0
    %248 = vmatprep.subr.bf16.mxu0 0
    %249 = vmatpush1.bf16.msra.mxu0 0
    %250 = vmatprep.subr.bf16.mxu0 0
    %251 = vmatpush1.bf16.msra.mxu0 0
    %252 = vmatprep.subr.bf16.mxu0 0
    %253 = vmatpush1.bf16.msra.mxu0 0
    %254 = vmatprep.subr.bf16.mxu0 0
    %255 = vmatpush1.bf16.msra.mxu0 0
    %256 = vmatprep.subr.bf16.mxu0 0
    %257 = vmatpush1.bf16.msra.mxu0 0
    %258 = vmatprep.subr.bf16.mxu0 0
    %259 = vmatpush1.bf16.msra.mxu0 0
    %260 = vmatprep.subr.bf16.mxu0 0
    %261 = vmatpush1.bf16.msra.mxu0 0
    %262 = vmatprep.subr.bf16.mxu0 0
    %263 = vmatpush1.bf16.msra.mxu0 0
    %264 = vmatprep.subr.bf16.mxu0 0
    %265 = vmatpush1.bf16.msra.mxu0 0
    %266 = vmatprep.subr.bf16.mxu0 0
    %267 = vmatpush1.bf16.msra.mxu0 0
    %268 = vmatprep.mubr.bf16.mxu0 0
    %269 = vmatmul.mubr.bf16.gmra.mrb[0].mxu0 %v230
    %v270 = vpop.f32.mrb[0].mxu0
    %v271 = vadd.f32 0.0, %v270
    %v272 = vpop.f32.mrb[0].mxu0
    %v273 = vpop.f32.mrb[0].mxu0
    %v274 = vpop.f32.mrb[0].mxu0
    %275 = vdwg.mxu0
    %v276 = vrcp.pop %v227
    %v277 = vmul.f32 %v271, %v276
    %v278 = vpack.c.bf16 %v277, %v277
    %279 = vrot.lane.b32.xlu0 %v166, 112
    %v280 = vpop.permute.xlu0 %279
    %281 = vrot.lane.b32.xlu0 %v166, 48
    %v282 = vpop.permute.xlu0 %281
    %v284 = vsel %vm171, %v280, 0
    %v287 = vsel %vm171, %v282, 0
    %289 = vmatprep.subr.bf16.mxu0 0
    %290 = vmatpush1.bf16.xpose.msra.mxu0 %v287
    %291 = vmatprep.subr.bf16.mxu0 0
    %292 = vmatpush1.bf16.xpose.msra.mxu0 0
    %293 = vmatprep.subr.bf16.mxu0 0
    %294 = vmatpush1.bf16.xpose.msra.mxu0 0
    %295 = vmatprep.subr.bf16.mxu0 0
    %296 = vmatpush1.bf16.xpose.msra.mxu0 0
    %297 = vmatprep.subr.bf16.mxu0 0
    %298 = vmatpush1.bf16.xpose.msra.mxu0 0
    %299 = vmatprep.subr.bf16.mxu0 0
    %300 = vmatpush1.bf16.xpose.msra.mxu0 0
    %301 = vmatprep.subr.bf16.mxu0 0
    %302 = vmatpush1.bf16.xpose.msra.mxu0 0
    %303 = vmatprep.subr.bf16.mxu0 0
    %304 = vmatpush1.bf16.xpose.msra.mxu0 0
    %305 = vmatprep.subr.bf16.mxu0 0
    %306 = vmatpush1.bf16.xpose.msra.mxu0 0
    %307 = vmatprep.subr.bf16.mxu0 0
    %308 = vmatpush1.bf16.xpose.msra.mxu0 0
    %309 = vmatprep.subr.bf16.mxu0 0
    %310 = vmatpush1.bf16.xpose.msra.mxu0 0
    %311 = vmatprep.subr.bf16.mxu0 0
    %312 = vmatpush1.bf16.xpose.msra.mxu0 0
    %313 = vmatprep.subr.bf16.mxu0 0
    %314 = vmatpush1.bf16.xpose.msra.mxu0 0
    %315 = vmatprep.subr.bf16.mxu0 0
    %316 = vmatpush1.bf16.xpose.msra.mxu0 0
    %317 = vmatprep.subr.bf16.mxu0 0
    %318 = vmatpush1.bf16.xpose.msra.mxu0 0
    %319 = vmatprep.subr.bf16.mxu0 0
    %320 = vmatpush1.bf16.xpose.msra.mxu0 0
    %321 = vmatprep.mubr.bf16.mxu0 0
    %322 = vmatmul.mubr.bf16.gmra.mrb[0].mxu0 %v284
    %v323 = vpop.f32.mrb[0].mxu0
    %v324 = vadd.f32 0.0, %v323
    %v325 = vpop.f32.mrb[0].mxu0
    %v326 = vpop.f32.mrb[0].mxu0
    %v327 = vpop.f32.mrb[0].mxu0
    %328 = vdwg.mxu0
    %v329 = vsel %vm218, %v324, -inf
    %330 = vmax.xlane.f32.xlu0 %v329
    %v331 = vpop.xlane.xlu0 %330
    %v332 = vsub.f32 %v324, %v331
    %v333 = vmul.f32 %v332, 1.442695
    %v334 = vpow.pop %v333
    %v335 = vsel %vm218, %v334, 0.0
    %336 = vadd.xlane.f32.xlu0 %v335
    %v337 = vpop.xlane.xlu0 %336
    %v338 = vpack.c.bf16 %v334, %v334
    %340 = vrot.lane.b32.xlu0 %v167, 112
    %v341 = vpop.permute.xlu0 %340
    %v343 = vsel %vm218, %v338, 0
    %v346 = vsel %vm232, %v341, 0
    %348 = vmatprep.subr.bf16.mxu0 0
    %349 = vmatpush1.bf16.msra.mxu0 %v346
    %350 = vmatprep.subr.bf16.mxu0 0
    %351 = vmatpush1.bf16.msra.mxu0 0
    %352 = vmatprep.subr.bf16.mxu0 0
    %353 = vmatpush1.bf16.msra.mxu0 0
    %354 = vmatprep.subr.bf16.mxu0 0
    %355 = vmatpush1.bf16.msra.mxu0 0
    %356 = vmatprep.subr.bf16.mxu0 0
    %357 = vmatpush1.bf16.msra.mxu0 0
    %358 = vmatprep.subr.bf16.mxu0 0
    %359 = vmatpush1.bf16.msra.mxu0 0
    %360 = vmatprep.subr.bf16.mxu0 0
    %361 = vmatpush1.bf16.msra.mxu0 0
    %362 = vmatprep.subr.bf16.mxu0 0
    %363 = vmatpush1.bf16.msra.mxu0 0
    %364 = vmatprep.subr.bf16.mxu0 0
    %365 = vmatpush1.bf16.msra.mxu0 0
    %366 = vmatprep.subr.bf16.mxu0 0
    %367 = vmatpush1.bf16.msra.mxu0 0
    %368 = vmatprep.subr.bf16.mxu0 0
    %369 = vmatpush1.bf16.msra.mxu0 0
    %370 = vmatprep.subr.bf16.mxu0 0
    %371 = vmatpush1.bf16.msra.mxu0 0
    %372 = vmatprep.subr.bf16.mxu0 0
    %373 = vmatpush1.bf16.msra.mxu0 0
    %374 = vmatprep.subr.bf16.mxu0 0
    %375 = vmatpush1.bf16.msra.mxu0 0
    %376 = vmatprep.subr.bf16.mxu0 0
    %377 = vmatpush1.bf16.msra.mxu0 0
    %378 = vmatprep.subr.bf16.mxu0 0
    %379 = vmatpush1.bf16.msra.mxu0 0
    %380 = vmatprep.mubr.bf16.mxu0 0
    %381 = vmatmul.mubr.bf16.gmra.mrb[0].mxu0 %v343
    %v382 = vpop.f32.mrb[0].mxu0
    %v383 = vadd.f32 0.0, %v382
    %v384 = vpop.f32.mrb[0].mxu0
    %v385 = vpop.f32.mrb[0].mxu0
    %v386 = vpop.f32.mrb[0].mxu0
    %387 = vdwg.mxu0
    %v388 = vrcp.pop %v337
    %v389 = vmul.f32 %v383, %v388
    %v390 = vpack.c.bf16 %v389, %v389
    %391 = vrot.lane.b32.xlu0 %v166, 96
    %v392 = vpop.permute.xlu0 %391
    %393 = vrot.lane.b32.xlu0 %v166, 32
    %v394 = vpop.permute.xlu0 %393
    %v396 = vsel %vm171, %v392, 0
    %v399 = vsel %vm171, %v394, 0
    %401 = vmatprep.subr.bf16.mxu0 0
    %402 = vmatpush1.bf16.xpose.msra.mxu0 %v399
    %403 = vmatprep.subr.bf16.mxu0 0
    %404 = vmatpush1.bf16.xpose.msra.mxu0 0
    %405 = vmatprep.subr.bf16.mxu0 0
    %406 = vmatpush1.bf16.xpose.msra.mxu0 0
    %407 = vmatprep.subr.bf16.mxu0 0
    %408 = vmatpush1.bf16.xpose.msra.mxu0 0
    %409 = vmatprep.subr.bf16.mxu0 0
    %410 = vmatpush1.bf16.xpose.msra.mxu0 0
    %411 = vmatprep.subr.bf16.mxu0 0
    %412 = vmatpush1.bf16.xpose.msra.mxu0 0
    %413 = vmatprep.subr.bf16.mxu0 0
    %414 = vmatpush1.bf16.xpose.msra.mxu0 0
    %415 = vmatprep.subr.bf16.mxu0 0
    %416 = vmatpush1.bf16.xpose.msra.mxu0 0
    %417 = vmatprep.subr.bf16.mxu0 0
    %418 = vmatpush1.bf16.xpose.msra.mxu0 0
    %419 = vmatprep.subr.bf16.mxu0 0
    %420 = vmatpush1.bf16.xpose.msra.mxu0 0
    %421 = vmatprep.subr.bf16.mxu0 0
    %422 = vmatpush1.bf16.xpose.msra.mxu0 0
    %423 = vmatprep.subr.bf16.mxu0 0
    %424 = vmatpush1.bf16.xpose.msra.mxu0 0
    %425 = vmatprep.subr.bf16.mxu0 0
    %426 = vmatpush1.bf16.xpose.msra.mxu0 0
    %427 = vmatprep.subr.bf16.mxu0 0
    %428 = vmatpush1.bf16.xpose.msra.mxu0 0
    %429 = vmatprep.subr.bf16.mxu0 0
    %430 = vmatpush1.bf16.xpose.msra.mxu0 0
    %431 = vmatprep.subr.bf16.mxu0 0
    %432 = vmatpush1.bf16.xpose.msra.mxu0 0
    %433 = vmatprep.mubr.bf16.mxu0 0
    %434 = vmatmul.mubr.bf16.gmra.mrb[0].mxu0 %v396
    %v435 = vpop.f32.mrb[0].mxu0
    %v436 = vadd.f32 0.0, %v435
    %v437 = vpop.f32.mrb[0].mxu0
    %v438 = vpop.f32.mrb[0].mxu0
    %v439 = vpop.f32.mrb[0].mxu0
    %440 = vdwg.mxu0
    %v441 = vsel %vm218, %v436, -inf
    %442 = vmax.xlane.f32.xlu0 %v441
    %v443 = vpop.xlane.xlu0 %442
    %v444 = vsub.f32 %v436, %v443
    %v445 = vmul.f32 %v444, 1.442695
    %v446 = vpow.pop %v445
    %v447 = vsel %vm218, %v446, 0.0
    %448 = vadd.xlane.f32.xlu0 %v447
    %v449 = vpop.xlane.xlu0 %448
    %v450 = vpack.c.bf16 %v446, %v446
    %451 = vrot.lane.b32.xlu0 %v167, 96
    %v452 = vpop.permute.xlu0 %451
    %v454 = vsel %vm218, %v450, 0
    %v457 = vsel %vm232, %v452, 0
    %459 = vmatprep.subr.bf16.mxu0 0
    %460 = vmatpush1.bf16.msra.mxu0 %v457
    %461 = vmatprep.subr.bf16.mxu0 0
    %462 = vmatpush1.bf16.msra.mxu0 0
    %463 = vmatprep.subr.bf16.mxu0 0
    %464 = vmatpush1.bf16.msra.mxu0 0
    %465 = vmatprep.subr.bf16.mxu0 0
    %466 = vmatpush1.bf16.msra.mxu0 0
    %467 = vmatprep.subr.bf16.mxu0 0
    %468 = vmatpush1.bf16.msra.mxu0 0
    %469 = vmatprep.subr.bf16.mxu0 0
    %470 = vmatpush1.bf16.msra.mxu0 0
    %471 = vmatprep.subr.bf16.mxu0 0
    %472 = vmatpush1.bf16.msra.mxu0 0
    %473 = vmatprep.subr.bf16.mxu0 0
    %474 = vmatpush1.bf16.msra.mxu0 0
    %475 = vmatprep.subr.bf16.mxu0 0
    %476 = vmatpush1.bf16.msra.mxu0 0
    %477 = vmatprep.subr.bf16.mxu0 0
    %478 = vmatpush1.bf16.msra.mxu0 0
    %479 = vmatprep.subr.bf16.mxu0 0
    %480 = vmatpush1.bf16.msra.mxu0 0
    %481 = vmatprep.subr.bf16.mxu0 0
    %482 = vmatpush1.bf16.msra.mxu0 0
    %483 = vmatprep.subr.bf16.mxu0 0
    %484 = vmatpush1.bf16.msra.mxu0 0
    %485 = vmatprep.subr.bf16.mxu0 0
    %486 = vmatpush1.bf16.msra.mxu0 0
    %487 = vmatprep.subr.bf16.mxu0 0
    %488 = vmatpush1.bf16.msra.mxu0 0
    %489 = vmatprep.subr.bf16.mxu0 0
    %490 = vmatpush1.bf16.msra.mxu0 0
    %491 = vmatprep.mubr.bf16.mxu0 0
    %492 = vmatmul.mubr.bf16.gmra.mrb[0].mxu0 %v454
    %v493 = vpop.f32.mrb[0].mxu0
    %v494 = vadd.f32 0.0, %v493
    %v495 = vpop.f32.mrb[0].mxu0
    %v496 = vpop.f32.mrb[0].mxu0
    %v497 = vpop.f32.mrb[0].mxu0
    %498 = vdwg.mxu0
    %v499 = vrcp.pop %v449
    %v500 = vmul.f32 %v494, %v499
    %v501 = vpack.c.bf16 %v500, %v500
    %502 = vrot.lane.b32.xlu0 %v166, 80
    %v503 = vpop.permute.xlu0 %502
    %504 = vrot.lane.b32.xlu0 %v166, 16
    %v505 = vpop.permute.xlu0 %504
    %v507 = vsel %vm171, %v503, 0
    %v510 = vsel %vm171, %v505, 0
    %512 = vmatprep.subr.bf16.mxu0 0
    %513 = vmatpush1.bf16.xpose.msra.mxu0 %v510
    %514 = vmatprep.subr.bf16.mxu0 0
    %515 = vmatpush1.bf16.xpose.msra.mxu0 0
    %516 = vmatprep.subr.bf16.mxu0 0
    %517 = vmatpush1.bf16.xpose.msra.mxu0 0
    %518 = vmatprep.subr.bf16.mxu0 0
    %519 = vmatpush1.bf16.xpose.msra.mxu0 0
    %520 = vmatprep.subr.bf16.mxu0 0
    %521 = vmatpush1.bf16.xpose.msra.mxu0 0
    %522 = vmatprep.subr.bf16.mxu0 0
    %523 = vmatpush1.bf16.xpose.msra.mxu0 0
    %524 = vmatprep.subr.bf16.mxu0 0
    %525 = vmatpush1.bf16.xpose.msra.mxu0 0
    %526 = vmatprep.subr.bf16.mxu0 0
    %527 = vmatpush1.bf16.xpose.msra.mxu0 0
    %528 = vmatprep.subr.bf16.mxu0 0
    %529 = vmatpush1.bf16.xpose.msra.mxu0 0
    %530 = vmatprep.subr.bf16.mxu0 0
    %531 = vmatpush1.bf16.xpose.msra.mxu0 0
    %532 = vmatprep.subr.bf16.mxu0 0
    %533 = vmatpush1.bf16.xpose.msra.mxu0 0
    %534 = vmatprep.subr.bf16.mxu0 0
    %535 = vmatpush1.bf16.xpose.msra.mxu0 0
    %536 = vmatprep.subr.bf16.mxu0 0
    %537 = vmatpush1.bf16.xpose.msra.mxu0 0
    %538 = vmatprep.subr.bf16.mxu0 0
    %539 = vmatpush1.bf16.xpose.msra.mxu0 0
    %540 = vmatprep.subr.bf16.mxu0 0
    %541 = vmatpush1.bf16.xpose.msra.mxu0 0
    %542 = vmatprep.subr.bf16.mxu0 0
    %543 = vmatpush1.bf16.xpose.msra.mxu0 0
    %544 = vmatprep.mubr.bf16.mxu0 0
    %545 = vmatmul.mubr.bf16.gmra.mrb[0].mxu0 %v507
    %v546 = vpop.f32.mrb[0].mxu0
    %v547 = vadd.f32 0.0, %v546
    %v548 = vpop.f32.mrb[0].mxu0
    %v549 = vpop.f32.mrb[0].mxu0
    %v550 = vpop.f32.mrb[0].mxu0
    %551 = vdwg.mxu0
    %v552 = vsel %vm218, %v547, -inf
    %553 = vmax.xlane.f32.xlu0 %v552
    %v554 = vpop.xlane.xlu0 %553
    %v555 = vsub.f32 %v547, %v554
    %v556 = vmul.f32 %v555, 1.442695
    %v557 = vpow.pop %v556
    %v558 = vsel %vm218, %v557, 0.0
    %559 = vadd.xlane.f32.xlu0 %v558
    %v560 = vpop.xlane.xlu0 %559
    %v561 = vpack.c.bf16 %v557, %v557
    %562 = vrot.lane.b32.xlu0 %v167, 80
    %v563 = vpop.permute.xlu0 %562
    %v565 = vsel %vm218, %v561, 0
    %v568 = vsel %vm232, %v563, 0
    %570 = vmatprep.subr.bf16.mxu0 0
    %571 = vmatpush1.bf16.msra.mxu0 %v568
    %572 = vmatprep.subr.bf16.mxu0 0
    %573 = vmatpush1.bf16.msra.mxu0 0
    %574 = vmatprep.subr.bf16.mxu0 0
    %575 = vmatpush1.bf16.msra.mxu0 0
    %576 = vmatprep.subr.bf16.mxu0 0
    %577 = vmatpush1.bf16.msra.mxu0 0
    %578 = vmatprep.subr.bf16.mxu0 0
    %579 = vmatpush1.bf16.msra.mxu0 0
    %580 = vmatprep.subr.bf16.mxu0 0
    %581 = vmatpush1.bf16.msra.mxu0 0
    %582 = vmatprep.subr.bf16.mxu0 0
    %583 = vmatpush1.bf16.msra.mxu0 0
    %584 = vmatprep.subr.bf16.mxu0 0
    %585 = vmatpush1.bf16.msra.mxu0 0
    %586 = vmatprep.subr.bf16.mxu0 0
    %587 = vmatpush1.bf16.msra.mxu0 0
    %588 = vmatprep.subr.bf16.mxu0 0
    %589 = vmatpush1.bf16.msra.mxu0 0
    %590 = vmatprep.subr.bf16.mxu0 0
    %591 = vmatpush1.bf16.msra.mxu0 0
    %592 = vmatprep.subr.bf16.mxu0 0
    %593 = vmatpush1.bf16.msra.mxu0 0
    %594 = vmatprep.subr.bf16.mxu0 0
    %595 = vmatpush1.bf16.msra.mxu0 0
    %596 = vmatprep.subr.bf16.mxu0 0
    %597 = vmatpush1.bf16.msra.mxu0 0
    %598 = vmatprep.subr.bf16.mxu0 0
    %599 = vmatpush1.bf16.msra.mxu0 0
    %600 = vmatprep.subr.bf16.mxu0 0
    %601 = vmatpush1.bf16.msra.mxu0 0
    %602 = vmatprep.mubr.bf16.mxu0 0
    %603 = vmatmul.mubr.bf16.gmra.mrb[0].mxu0 %v565
    %v604 = vpop.f32.mrb[0].mxu0
    %v605 = vadd.f32 0.0, %v604
    %v606 = vpop.f32.mrb[0].mxu0
    %v607 = vpop.f32.mrb[0].mxu0
    %v608 = vpop.f32.mrb[0].mxu0
    %609 = vdwg.mxu0
    %v610 = vrcp.pop %v560
    %v611 = vmul.f32 %v605, %v610
    %v612 = vpack.c.bf16 %v611, %v611
    %614 = vrot.lane.b32.xlu0 %v390, 16
    %v615 = vpop.permute.xlu0 %614
    %617 = vrot.lane.b32.xlu0 %v501, 32
    %v618 = vpop.permute.xlu0 %617
    %620 = vrot.lane.b32.xlu0 %v612, 48
    %v621 = vpop.permute.xlu0 %620
    %v624 = vsel %vm171, %v278, %v615
    %vm625 = vcmask 261120
    %v627 = vsel %vm625, %v624, %v618
    %vm628 = vcmask 392192
    %v630 = vsel %vm628, %v627, %v621
    %v631 = vrot.slane %v166, 4
    %632 = vrot.lane.b32.xlu0 %v631, 64
    %v633 = vpop.permute.xlu0 %632
    %v635 = vsel %vm171, %v631, 0
    %v638 = vsel %vm171, %v633, 0
    %640 = vmatprep.subr.bf16.mxu0 0
    %641 = vmatpush1.bf16.xpose.msra.mxu0 %v638
    %642 = vmatprep.subr.bf16.mxu0 0
    %643 = vmatpush1.bf16.xpose.msra.mxu0 0
    %644 = vmatprep.subr.bf16.mxu0 0
    %645 = vmatpush1.bf16.xpose.msra.mxu0 0
    %646 = vmatprep.subr.bf16.mxu0 0
    %647 = vmatpush1.bf16.xpose.msra.mxu0 0
    %648 = vmatprep.subr.bf16.mxu0 0
    %649 = vmatpush1.bf16.xpose.msra.mxu0 0
    %650 = vmatprep.subr.bf16.mxu0 0
    %651 = vmatpush1.bf16.xpose.msra.mxu0 0
    %652 = vmatprep.subr.bf16.mxu0 0
    %653 = vmatpush1.bf16.xpose.msra.mxu0 0
    %654 = vmatprep.subr.bf16.mxu0 0
    %655 = vmatpush1.bf16.xpose.msra.mxu0 0
    %656 = vmatprep.subr.bf16.mxu0 0
    %657 = vmatpush1.bf16.xpose.msra.mxu0 0
    %658 = vmatprep.subr.bf16.mxu0 0
    %659 = vmatpush1.bf16.xpose.msra.mxu0 0
    %660 = vmatprep.subr.bf16.mxu0 0
    %661 = vmatpush1.bf16.xpose.msra.mxu0 0
    %662 = vmatprep.subr.bf16.mxu0 0
    %663 = vmatpush1.bf16.xpose.msra.mxu0 0
    %664 = vmatprep.subr.bf16.mxu0 0
    %665 = vmatpush1.bf16.xpose.msra.mxu0 0
    %666 = vmatprep.subr.bf16.mxu0 0
    %667 = vmatpush1.bf16.xpose.msra.mxu0 0
    %668 = vmatprep.subr.bf16.mxu0 0
    %669 = vmatpush1.bf16.xpose.msra.mxu0 0
    %670 = vmatprep.subr.bf16.mxu0 0
    %671 = vmatpush1.bf16.xpose.msra.mxu0 0
    %672 = vmatprep.mubr.bf16.mxu0 0
    %673 = vmatmul.mubr.bf16.gmra.mrb[0].mxu0 %v635
    %v674 = vpop.f32.mrb[0].mxu0
    %v675 = vadd.f32 0.0, %v674
    %v676 = vpop.f32.mrb[0].mxu0
    %v677 = vpop.f32.mrb[0].mxu0
    %v678 = vpop.f32.mrb[0].mxu0
    %679 = vdwg.mxu0
    %v680 = vsel %vm218, %v675, -inf
    %681 = vmax.xlane.f32.xlu0 %v680
    %v682 = vpop.xlane.xlu0 %681
    %v683 = vsub.f32 %v675, %v682
    %v684 = vmul.f32 %v683, 1.442695
    %v685 = vpow.pop %v684
    %v686 = vsel %vm218, %v685, 0.0
    %687 = vadd.xlane.f32.xlu0 %v686
    %v688 = vpop.xlane.xlu0 %687
    %v689 = vpack.c.bf16 %v685, %v685
    %v690 = vrot.slane %v167, 4
    %v692 = vsel %vm218, %v689, 0
    %v695 = vsel %vm232, %v690, 0
    %697 = vmatprep.subr.bf16.mxu0 0
    %698 = vmatpush1.bf16.msra.mxu0 %v695
    %699 = vmatprep.subr.bf16.mxu0 0
    %700 = vmatpush1.bf16.msra.mxu0 0
    %701 = vmatprep.subr.bf16.mxu0 0
    %702 = vmatpush1.bf16.msra.mxu0 0
    %703 = vmatprep.subr.bf16.mxu0 0
    %704 = vmatpush1.bf16.msra.mxu0 0
    %705 = vmatprep.subr.bf16.mxu0 0
    %706 = vmatpush1.bf16.msra.mxu0 0
    %707 = vmatprep.subr.bf16.mxu0 0
    %708 = vmatpush1.bf16.msra.mxu0 0
    %709 = vmatprep.subr.bf16.mxu0 0
    %710 = vmatpush1.bf16.msra.mxu0 0
    %711 = vmatprep.subr.bf16.mxu0 0
    %712 = vmatpush1.bf16.msra.mxu0 0
    %713 = vmatprep.subr.bf16.mxu0 0
    %714 = vmatpush1.bf16.msra.mxu0 0
    %715 = vmatprep.subr.bf16.mxu0 0
    %716 = vmatpush1.bf16.msra.mxu0 0
    %717 = vmatprep.subr.bf16.mxu0 0
    %718 = vmatpush1.bf16.msra.mxu0 0
    %719 = vmatprep.subr.bf16.mxu0 0
    %720 = vmatpush1.bf16.msra.mxu0 0
    %721 = vmatprep.subr.bf16.mxu0 0
    %722 = vmatpush1.bf16.msra.mxu0 0
    %723 = vmatprep.subr.bf16.mxu0 0
    %724 = vmatpush1.bf16.msra.mxu0 0
    %725 = vmatprep.subr.bf16.mxu0 0
    %726 = vmatpush1.bf16.msra.mxu0 0
    %727 = vmatprep.subr.bf16.mxu0 0
    %728 = vmatpush1.bf16.msra.mxu0 0
    %729 = vmatprep.mubr.bf16.mxu0 0
    %730 = vmatmul.mubr.bf16.gmra.mrb[0].mxu0 %v692
    %v731 = vpop.f32.mrb[0].mxu0
    %v732 = vadd.f32 0.0, %v731
    %v733 = vpop.f32.mrb[0].mxu0
    %v734 = vpop.f32.mrb[0].mxu0
    %v735 = vpop.f32.mrb[0].mxu0
    %736 = vdwg.mxu0
    %v737 = vrcp.pop %v688
    %v738 = vmul.f32 %v732, %v737
    %v739 = vpack.c.bf16 %v738, %v738
    %740 = vrot.lane.b32.xlu0 %v631, 112
    %v741 = vpop.permute.xlu0 %740
    %742 = vrot.lane.b32.xlu0 %v631, 48
    %v743 = vpop.permute.xlu0 %742
    %v745 = vsel %vm171, %v741, 0
    %v748 = vsel %vm171, %v743, 0
    %750 = vmatprep.subr.bf16.mxu0 0
    %751 = vmatpush1.bf16.xpose.msra.mxu0 %v748
    %752 = vmatprep.subr.bf16.mxu0 0
    %753 = vmatpush1.bf16.xpose.msra.mxu0 0
    %754 = vmatprep.subr.bf16.mxu0 0
    %755 = vmatpush1.bf16.xpose.msra.mxu0 0
    %756 = vmatprep.subr.bf16.mxu0 0
    %757 = vmatpush1.bf16.xpose.msra.mxu0 0
    %758 = vmatprep.subr.bf16.mxu0 0
    %759 = vmatpush1.bf16.xpose.msra.mxu0 0
    %760 = vmatprep.subr.bf16.mxu0 0
    %761 = vmatpush1.bf16.xpose.msra.mxu0 0
    %762 = vmatprep.subr.bf16.mxu0 0
    %763 = vmatpush1.bf16.xpose.msra.mxu0 0
    %764 = vmatprep.subr.bf16.mxu0 0
    %765 = vmatpush1.bf16.xpose.msra.mxu0 0
    %766 = vmatprep.subr.bf16.mxu0 0
    %767 = vmatpush1.bf16.xpose.msra.mxu0 0
    %768 = vmatprep.subr.bf16.mxu0 0
    %769 = vmatpush1.bf16.xpose.msra.mxu0 0
    %770 = vmatprep.subr.bf16.mxu0 0
    %771 = vmatpush1.bf16.xpose.msra.mxu0 0
    %772 = vmatprep.subr.bf16.mxu0 0
    %773 = vmatpush1.bf16.xpose.msra.mxu0 0
    %774 = vmatprep.subr.bf16.mxu0 0
    %775 = vmatpush1.bf16.xpose.msra.mxu0 0
    %776 = vmatprep.subr.bf16.mxu0 0
    %777 = vmatpush1.bf16.xpose.msra.mxu0 0
    %778 = vmatprep.subr.bf16.mxu0 0
    %779 = vmatpush1.bf16.xpose.msra.mxu0 0
    %780 = vmatprep.subr.bf16.mxu0 0
    %781 = vmatpush1.bf16.xpose.msra.mxu0 0
    %782 = vmatprep.mubr.bf16.mxu0 0
    %783 = vmatmul.mubr.bf16.gmra.mrb[0].mxu0 %v745
    %v784 = vpop.f32.mrb[0].mxu0
    %v785 = vadd.f32 0.0, %v784
    %v786 = vpop.f32.mrb[0].mxu0
    %v787 = vpop.f32.mrb[0].mxu0
    %v788 = vpop.f32.mrb[0].mxu0
    %789 = vdwg.mxu0
    %v790 = vsel %vm218, %v785, -inf
    %791 = vmax.xlane.f32.xlu0 %v790
    %v792 = vpop.xlane.xlu0 %791
    %v793 = vsub.f32 %v785, %v792
    %v794 = vmul.f32 %v793, 1.442695
    %v795 = vpow.pop %v794
    %v796 = vsel %vm218, %v795, 0.0
    %797 = vadd.xlane.f32.xlu0 %v796
    %v798 = vpop.xlane.xlu0 %797
    %v799 = vpack.c.bf16 %v795, %v795
    %800 = vrot.lane.b32.xlu0 %v690, 112
    %v801 = vpop.permute.xlu0 %800
    %v803 = vsel %vm218, %v799, 0
    %v806 = vsel %vm232, %v801, 0
    %808 = vmatprep.subr.bf16.mxu0 0
    %809 = vmatpush1.bf16.msra.mxu0 %v806
    %810 = vmatprep.subr.bf16.mxu0 0
    %811 = vmatpush1.bf16.msra.mxu0 0
    %812 = vmatprep.subr.bf16.mxu0 0
    %813 = vmatpush1.bf16.msra.mxu0 0
    %814 = vmatprep.subr.bf16.mxu0 0
    %815 = vmatpush1.bf16.msra.mxu0 0
    %816 = vmatprep.subr.bf16.mxu0 0
    %817 = vmatpush1.bf16.msra.mxu0 0
    %818 = vmatprep.subr.bf16.mxu0 0
    %819 = vmatpush1.bf16.msra.mxu0 0
    %820 = vmatprep.subr.bf16.mxu0 0
    %821 = vmatpush1.bf16.msra.mxu0 0
    %822 = vmatprep.subr.bf16.mxu0 0
    %823 = vmatpush1.bf16.msra.mxu0 0
    %824 = vmatprep.subr.bf16.mxu0 0
    %825 = vmatpush1.bf16.msra.mxu0 0
    %826 = vmatprep.subr.bf16.mxu0 0
    %827 = vmatpush1.bf16.msra.mxu0 0
    %828 = vmatprep.subr.bf16.mxu0 0
    %829 = vmatpush1.bf16.msra.mxu0 0
    %830 = vmatprep.subr.bf16.mxu0 0
    %831 = vmatpush1.bf16.msra.mxu0 0
    %832 = vmatprep.subr.bf16.mxu0 0
    %833 = vmatpush1.bf16.msra.mxu0 0
    %834 = vmatprep.subr.bf16.mxu0 0
    %835 = vmatpush1.bf16.msra.mxu0 0
    %836 = vmatprep.subr.bf16.mxu0 0
    %837 = vmatpush1.bf16.msra.mxu0 0
    %838 = vmatprep.subr.bf16.mxu0 0
    %839 = vmatpush1.bf16.msra.mxu0 0
    %840 = vmatprep.mubr.bf16.mxu0 0
    %841 = vmatmul.mubr.bf16.gmra.mrb[0].mxu0 %v803
    %v842 = vpop.f32.mrb[0].mxu0
    %v843 = vadd.f32 0.0, %v842
    %v844 = vpop.f32.mrb[0].mxu0
    %v845 = vpop.f32.mrb[0].mxu0
    %v846 = vpop.f32.mrb[0].mxu0
    %847 = vdwg.mxu0
    %v848 = vrcp.pop %v798
    %v849 = vmul.f32 %v843, %v848
    %v850 = vpack.c.bf16 %v849, %v849
    %851 = vrot.lane.b32.xlu0 %v631, 96
    %v852 = vpop.permute.xlu0 %851
    %853 = vrot.lane.b32.xlu0 %v631, 32
    %v854 = vpop.permute.xlu0 %853
    %v856 = vsel %vm171, %v852, 0
    %v859 = vsel %vm171, %v854, 0
    %861 = vmatprep.subr.bf16.mxu0 0
    %862 = vmatpush1.bf16.xpose.msra.mxu0 %v859
    %863 = vmatprep.subr.bf16.mxu0 0
    %864 = vmatpush1.bf16.xpose.msra.mxu0 0
    %865 = vmatprep.subr.bf16.mxu0 0
    %866 = vmatpush1.bf16.xpose.msra.mxu0 0
    %867 = vmatprep.subr.bf16.mxu0 0
    %868 = vmatpush1.bf16.xpose.msra.mxu0 0
    %869 = vmatprep.subr.bf16.mxu0 0
    %870 = vmatpush1.bf16.xpose.msra.mxu0 0
    %871 = vmatprep.subr.bf16.mxu0 0
    %872 = vmatpush1.bf16.xpose.msra.mxu0 0
    %873 = vmatprep.subr.bf16.mxu0 0
    %874 = vmatpush1.bf16.xpose.msra.mxu0 0
    %875 = vmatprep.subr.bf16.mxu0 0
    %876 = vmatpush1.bf16.xpose.msra.mxu0 0
    %877 = vmatprep.subr.bf16.mxu0 0
    %878 = vmatpush1.bf16.xpose.msra.mxu0 0
    %879 = vmatprep.subr.bf16.mxu0 0
    %880 = vmatpush1.bf16.xpose.msra.mxu0 0
    %881 = vmatprep.subr.bf16.mxu0 0
    %882 = vmatpush1.bf16.xpose.msra.mxu0 0
    %883 = vmatprep.subr.bf16.mxu0 0
    %884 = vmatpush1.bf16.xpose.msra.mxu0 0
    %885 = vmatprep.subr.bf16.mxu0 0
    %886 = vmatpush1.bf16.xpose.msra.mxu0 0
    %887 = vmatprep.subr.bf16.mxu0 0
    %888 = vmatpush1.bf16.xpose.msra.mxu0 0
    %889 = vmatprep.subr.bf16.mxu0 0
    %890 = vmatpush1.bf16.xpose.msra.mxu0 0
    %891 = vmatprep.subr.bf16.mxu0 0
    %892 = vmatpush1.bf16.xpose.msra.mxu0 0
    %893 = vmatprep.mubr.bf16.mxu0 0
    %894 = vmatmul.mubr.bf16.gmra.mrb[0].mxu0 %v856
    %v895 = vpop.f32.mrb[0].mxu0
    %v896 = vadd.f32 0.0, %v895
    %v897 = vpop.f32.mrb[0].mxu0
    %v898 = vpop.f32.mrb[0].mxu0
    %v899 = vpop.f32.mrb[0].mxu0
    %900 = vdwg.mxu0
    %v901 = vsel %vm218, %v896, -inf
    %902 = vmax.xlane.f32.xlu0 %v901
    %v903 = vpop.xlane.xlu0 %902
    %v904 = vsub.f32 %v896, %v903
    %v905 = vmul.f32 %v904, 1.442695
    %v906 = vpow.pop %v905
    %v907 = vsel %vm218, %v906, 0.0
    %908 = vadd.xlane.f32.xlu0 %v907
    %v909 = vpop.xlane.xlu0 %908
    %v910 = vpack.c.bf16 %v906, %v906
    %911 = vrot.lane.b32.xlu0 %v690, 96
    %v912 = vpop.permute.xlu0 %911
    %v914 = vsel %vm218, %v910, 0
    %v917 = vsel %vm232, %v912, 0
    %919 = vmatprep.subr.bf16.mxu0 0
    %920 = vmatpush1.bf16.msra.mxu0 %v917
    %921 = vmatprep.subr.bf16.mxu0 0
    %922 = vmatpush1.bf16.msra.mxu0 0
    %923 = vmatprep.subr.bf16.mxu0 0
    %924 = vmatpush1.bf16.msra.mxu0 0
    %925 = vmatprep.subr.bf16.mxu0 0
    %926 = vmatpush1.bf16.msra.mxu0 0
    %927 = vmatprep.subr.bf16.mxu0 0
    %928 = vmatpush1.bf16.msra.mxu0 0
    %929 = vmatprep.subr.bf16.mxu0 0
    %930 = vmatpush1.bf16.msra.mxu0 0
    %931 = vmatprep.subr.bf16.mxu0 0
    %932 = vmatpush1.bf16.msra.mxu0 0
    %933 = vmatprep.subr.bf16.mxu0 0
    %934 = vmatpush1.bf16.msra.mxu0 0
    %935 = vmatprep.subr.bf16.mxu0 0
    %936 = vmatpush1.bf16.msra.mxu0 0
    %937 = vmatprep.subr.bf16.mxu0 0
    %938 = vmatpush1.bf16.msra.mxu0 0
    %939 = vmatprep.subr.bf16.mxu0 0
    %940 = vmatpush1.bf16.msra.mxu0 0
    %941 = vmatprep.subr.bf16.mxu0 0
    %942 = vmatpush1.bf16.msra.mxu0 0
    %943 = vmatprep.subr.bf16.mxu0 0
    %944 = vmatpush1.bf16.msra.mxu0 0
    %945 = vmatprep.subr.bf16.mxu0 0
    %946 = vmatpush1.bf16.msra.mxu0 0
    %947 = vmatprep.subr.bf16.mxu0 0
    %948 = vmatpush1.bf16.msra.mxu0 0
    %949 = vmatprep.subr.bf16.mxu0 0
    %950 = vmatpush1.bf16.msra.mxu0 0
    %951 = vmatprep.mubr.bf16.mxu0 0
    %952 = vmatmul.mubr.bf16.gmra.mrb[0].mxu0 %v914
    %v953 = vpop.f32.mrb[0].mxu0
    %v954 = vadd.f32 0.0, %v953
    %v955 = vpop.f32.mrb[0].mxu0
    %v956 = vpop.f32.mrb[0].mxu0
    %v957 = vpop.f32.mrb[0].mxu0
    %958 = vdwg.mxu0
    %v959 = vrcp.pop %v909
    %v960 = vmul.f32 %v954, %v959
    %v961 = vpack.c.bf16 %v960, %v960
    %962 = vrot.lane.b32.xlu0 %v631, 80
    %v963 = vpop.permute.xlu0 %962
    %964 = vrot.lane.b32.xlu0 %v631, 16
    %v965 = vpop.permute.xlu0 %964
    %v967 = vsel %vm171, %v963, 0
    %v970 = vsel %vm171, %v965, 0
    %972 = vmatprep.subr.bf16.mxu0 0
    %973 = vmatpush1.bf16.xpose.msra.mxu0 %v970
    %974 = vmatprep.subr.bf16.mxu0 0
    %975 = vmatpush1.bf16.xpose.msra.mxu0 0
    %976 = vmatprep.subr.bf16.mxu0 0
    %977 = vmatpush1.bf16.xpose.msra.mxu0 0
    %978 = vmatprep.subr.bf16.mxu0 0
    %979 = vmatpush1.bf16.xpose.msra.mxu0 0
    %980 = vmatprep.subr.bf16.mxu0 0
    %981 = vmatpush1.bf16.xpose.msra.mxu0 0
    %982 = vmatprep.subr.bf16.mxu0 0
    %983 = vmatpush1.bf16.xpose.msra.mxu0 0
    %984 = vmatprep.subr.bf16.mxu0 0
    %985 = vmatpush1.bf16.xpose.msra.mxu0 0
    %986 = vmatprep.subr.bf16.mxu0 0
    %987 = vmatpush1.bf16.xpose.msra.mxu0 0
    %988 = vmatprep.subr.bf16.mxu0 0
    %989 = vmatpush1.bf16.xpose.msra.mxu0 0
    %990 = vmatprep.subr.bf16.mxu0 0
    %991 = vmatpush1.bf16.xpose.msra.mxu0 0
    %992 = vmatprep.subr.bf16.mxu0 0
    %993 = vmatpush1.bf16.xpose.msra.mxu0 0
    %994 = vmatprep.subr.bf16.mxu0 0
    %995 = vmatpush1.bf16.xpose.msra.mxu0 0
    %996 = vmatprep.subr.bf16.mxu0 0
    %997 = vmatpush1.bf16.xpose.msra.mxu0 0
    %998 = vmatprep.subr.bf16.mxu0 0
    %999 = vmatpush1.bf16.xpose.msra.mxu0 0
    %1000 = vmatprep.subr.bf16.mxu0 0
    %1001 = vmatpush1.bf16.xpose.msra.mxu0 0
    %1002 = vmatprep.subr.bf16.mxu0 0
    %1003 = vmatpush1.bf16.xpose.msra.mxu0 0
    %1004 = vmatprep.mubr.bf16.mxu0 0
    %1005 = vmatmul.mubr.bf16.gmra.mrb[0].mxu0 %v967
    %v1006 = vpop.f32.mrb[0].mxu0
    %v1007 = vadd.f32 0.0, %v1006
    %v1008 = vpop.f32.mrb[0].mxu0
    %v1009 = vpop.f32.mrb[0].mxu0
    %v1010 = vpop.f32.mrb[0].mxu0
    %1011 = vdwg.mxu0
    %v1012 = vsel %vm218, %v1007, -inf
    %1013 = vmax.xlane.f32.xlu0 %v1012
    %v1014 = vpop.xlane.xlu0 %1013
    %v1015 = vsub.f32 %v1007, %v1014
    %v1016 = vmul.f32 %v1015, 1.442695
    %v1017 = vpow.pop %v1016
    %v1018 = vsel %vm218, %v1017, 0.0
    %1019 = vadd.xlane.f32.xlu0 %v1018
    %v1020 = vpop.xlane.xlu0 %1019
    %v1021 = vpack.c.bf16 %v1017, %v1017
    %1022 = vrot.lane.b32.xlu0 %v690, 80
    %v1023 = vpop.permute.xlu0 %1022
    %v1025 = vsel %vm218, %v1021, 0
    %v1028 = vsel %vm232, %v1023, 0
    %1030 = vmatprep.subr.bf16.mxu0 0
    %1031 = vmatpush1.bf16.msra.mxu0 %v1028
    %1032 = vmatprep.subr.bf16.mxu0 0
    %1033 = vmatpush1.bf16.msra.mxu0 0
    %1034 = vmatprep.subr.bf16.mxu0 0
    %1035 = vmatpush1.bf16.msra.mxu0 0
    %1036 = vmatprep.subr.bf16.mxu0 0
    %1037 = vmatpush1.bf16.msra.mxu0 0
    %1038 = vmatprep.subr.bf16.mxu0 0
    %1039 = vmatpush1.bf16.msra.mxu0 0
    %1040 = vmatprep.subr.bf16.mxu0 0
    %1041 = vmatpush1.bf16.msra.mxu0 0
    %1042 = vmatprep.subr.bf16.mxu0 0
    %1043 = vmatpush1.bf16.msra.mxu0 0
    %1044 = vmatprep.subr.bf16.mxu0 0
    %1045 = vmatpush1.bf16.msra.mxu0 0
    %1046 = vmatprep.subr.bf16.mxu0 0
    %1047 = vmatpush1.bf16.msra.mxu0 0
    %1048 = vmatprep.subr.bf16.mxu0 0
    %1049 = vmatpush1.bf16.msra.mxu0 0
    %1050 = vmatprep.subr.bf16.mxu0 0
    %1051 = vmatpush1.bf16.msra.mxu0 0
    %1052 = vmatprep.subr.bf16.mxu0 0
    %1053 = vmatpush1.bf16.msra.mxu0 0
    %1054 = vmatprep.subr.bf16.mxu0 0
    %1055 = vmatpush1.bf16.msra.mxu0 0
    %1056 = vmatprep.subr.bf16.mxu0 0
    %1057 = vmatpush1.bf16.msra.mxu0 0
    %1058 = vmatprep.subr.bf16.mxu0 0
    %1059 = vmatpush1.bf16.msra.mxu0 0
    %1060 = vmatprep.subr.bf16.mxu0 0
    %1061 = vmatpush1.bf16.msra.mxu0 0
    %1062 = vmatprep.mubr.bf16.mxu0 0
    %1063 = vmatmul.mubr.bf16.gmra.mrb[0].mxu0 %v1025
    %v1064 = vpop.f32.mrb[0].mxu0
    %v1065 = vadd.f32 0.0, %v1064
    %v1066 = vpop.f32.mrb[0].mxu0
    %v1067 = vpop.f32.mrb[0].mxu0
    %v1068 = vpop.f32.mrb[0].mxu0
    %1069 = vdwg.mxu0
    %v1070 = vrcp.pop %v1020
    %v1071 = vmul.f32 %v1065, %v1070
    %v1072 = vpack.c.bf16 %v1071, %v1071
    %1074 = vrot.lane.b32.xlu0 %v850, 16
    %v1075 = vpop.permute.xlu0 %1074
    %1077 = vrot.lane.b32.xlu0 %v961, 32
    %v1078 = vpop.permute.xlu0 %1077
    %1080 = vrot.lane.b32.xlu0 %v1072, 48
    %v1081 = vpop.permute.xlu0 %1080
    %v1084 = vsel %vm171, %v739, %v1075
    %v1086 = vsel %vm625, %v1084, %v1078
    %v1088 = vsel %vm628, %v1086, %v1081
    %v1090 = vrot.slane %v1088, 4
    %v1092 = vsel %vm232, %v630, %v1090
    %v1093 = vld [vmem:[%s2] sm:$0xf]
    %v1094 = vld [vmem:[%s2 + $0x4] sm:$0xf]
    %v1095 = vld [vmem:[%s2 + $0x8] sm:$0xf]
    %v1096 = vld [vmem:[%s2 + $0xc] sm:$0xf]
    %v1097 = vld [vmem:[%s2 + $0x10] sm:$0xf]
    %v1098 = vld [vmem:[%s2 + $0x14] sm:$0xf]
    %v1099 = vld [vmem:[%s2 + $0x18] sm:$0xf]
    %v1100 = vld [vmem:[%s2 + $0x1c] sm:$0xf]
    %v1109 = vunpack.c.l.b16 %v1093
    %v1110 = vunpack.c.l.b16 %v1094
    %v1111 = vunpack.c.l.b16 %v1095
    %v1112 = vunpack.c.l.b16 %v1096
    %v1113 = vunpack.c.l.b16 %v1097
    %v1114 = vunpack.c.l.b16 %v1098
    %v1115 = vunpack.c.l.b16 %v1099
    %v1116 = vunpack.c.l.b16 %v1100
    %v1117 = vpack.c.b16 %v1110, %v1109
    %v1118 = vpack.c.b16 %v1112, %v1111
    %v1119 = vpack.c.b16 %v1114, %v1113
    %v1120 = vpack.c.b16 %v1116, %v1115
    %vm1125 = vcmask 523264
    %v1126 = vsel %vm1125, %v1092, 0
    %1128 = vmatprep.subr.bf16.mxu0 0
    %1129 = vmatpush1.bf16.msra.mxu0 %v1117
    %1130 = vmatprep.subr.bf16.mxu0 0
    %1131 = vmatpush1.bf16.msra.mxu0 %v1118
    %1132 = vmatprep.subr.bf16.mxu0 0
    %1133 = vmatpush1.bf16.msra.mxu0 %v1119
    %1134 = vmatprep.subr.bf16.mxu0 0
    %1135 = vmatpush1.bf16.msra.mxu0 %v1120
    %1136 = vmatprep.subr.bf16.mxu0 0
    %1137 = vmatpush1.bf16.msra.mxu0 0
    %1138 = vmatprep.subr.bf16.mxu0 0
    %1139 = vmatpush1.bf16.msra.mxu0 0
    %1140 = vmatprep.subr.bf16.mxu0 0
    %1141 = vmatpush1.bf16.msra.mxu0 0
    %1142 = vmatprep.subr.bf16.mxu0 0
    %1143 = vmatpush1.bf16.msra.mxu0 0
    %1144 = vmatprep.subr.bf16.mxu0 0
    %1145 = vmatpush1.bf16.msra.mxu0 0
    %1146 = vmatprep.subr.bf16.mxu0 0
    %1147 = vmatpush1.bf16.msra.mxu0 0
    %1148 = vmatprep.subr.bf16.mxu0 0
    %1149 = vmatpush1.bf16.msra.mxu0 0
    %1150 = vmatprep.subr.bf16.mxu0 0
    %1151 = vmatpush1.bf16.msra.mxu0 0
    %1152 = vmatprep.subr.bf16.mxu0 0
    %1153 = vmatpush1.bf16.msra.mxu0 0
    %1154 = vmatprep.subr.bf16.mxu0 0
    %1155 = vmatpush1.bf16.msra.mxu0 0
    %1156 = vmatprep.subr.bf16.mxu0 0
    %1157 = vmatpush1.bf16.msra.mxu0 0
    %1158 = vmatprep.subr.bf16.mxu0 0
    %1159 = vmatpush1.bf16.msra.mxu0 0
    %1160 = vmatprep.mubr.bf16.mxu0 0
    %1161 = vmatmul.mubr.bf16.gmra.mrb[0].mxu0 %v1126
    %v1162 = vpop.f32.mrb[0].mxu0
    %v1163 = vadd.f32 0.0, %v1162
    %v1164 = vpop.f32.mrb[0].mxu0
    %v1165 = vpop.f32.mrb[0].mxu0
    %v1166 = vadd.f32 0.0, %v1165
    %v1167 = vpop.f32.mrb[0].mxu0
    %1168 = vdwg.mxu0
    %v1169 = vld [vmem:[%s3] sm:$0x1]
    %v1171 = vlaneseq
    %v1172 = vshrl.u32 %v1171, 7
    %v1173 = vsub.s32 0, %v1172
    %v1174 = vrot.slane %v1169, %v1173
    %v1176 = vadd.f32 %v1163, %v1174
    %v1177 = vadd.f32 %v1166, %v1174
    %1178 = vst [vmem:[#allocation2] sm:$0xff] %v1176
    %1179 = vst [vmem:[#allocation2 + $0x8] sm:$0xff] %v1177
    // Predicated region
    $region18: #{tpu_custom_call.1} parent=1 // pred_check
      _
    $region19: #{tpu_custom_call.1} parent=1 // pred_check_branch
      %1181 = sbr.rel (0) target = $region21
    $region20: #{tpu_custom_call.1} parent=1 // pred_region
      %s1183 = ssub.s32 256, 256
      %1184 = vsyncadd [#allocation3], %s1183
      %s1185 = sshll.u32 [#allocation2], 4
      %s1186 = int_to_ptr.vmem [resolvable:$true] %s1185
      %1191 = dma.vmem_to_hbm [thread:$0]  %s1186, 256, %s4, [#allocation3], 128, 128, 8
    $region21: #{tpu_custom_call.1} parent=1 // pred_fallthru
      _
    // Predicated region
    $region22: #{tpu_custom_call.1} parent=1 // pred_check
      _
    $region23: #{tpu_custom_call.1} parent=1 // pred_check_branch
      %1193 = sbr.rel (0) target = $region25
    $region24: #{tpu_custom_call.1} parent=1 // pred_region
      %1194 = dma.done [#allocation3], 256
    $region25: #{tpu_custom_call.1} parent=1 // pred_fallthru
      _
    %1195 = vsyncpa [#allocation3], 1

</llo_original>
